<compile_context>
chip_gen: v7x
topology: tpu7x:2x2x1
jax: 0.10.0
libtpu: 0.0.40
codegen_flags: <defaults>
</compile_context>

<pallas_src>
import math
import functools

import jax
import jax.numpy as jnp
from jax.experimental import pallas as pl
from jax.experimental.pallas import tpu as pltpu


# ----------------------------------------------------------------------------
# Pallas kernel: one EncoderLayer for (one batch element, one query block)
# ----------------------------------------------------------------------------
def encoder_layer_kernel(xq_ref, xf_ref, bias_ref,
                         wq_ref, wkv_ref, wo_ref,
                         g1_ref, bn1_ref, g2_ref, bn2_ref,
                         w1_ref, b1_ref, w2_ref, b2_ref,
                         out_ref, *maybe_attn_ref,
                         nhead, dh, eps, ff_tile):
    H = nhead
    bf = jnp.bfloat16

    xq = xq_ref[0]                                   # (Tq, D) f32  query rows
    xf = xf_ref[0]                                   # (S,  D) f32  all rows (K/V)
    Tq, D = xq.shape

    # --- lane-dense projections (MXU, f32 accumulation) ----------------------
    # 1/sqrt(dh) is folded into wq at pack time; wkv is the fused (D, 2D) K|V.
    q2 = jnp.dot(xq.astype(bf), wq_ref[...], preferred_element_type=jnp.float32)
    kv2 = jnp.dot(xf.astype(bf), wkv_ref[...], preferred_element_type=jnp.float32)

    def split_heads(m):                              # (rows, H*dh) -> (H, rows, dh)
        return jnp.stack([m[:, h * dh:(h + 1) * dh] for h in range(H)], axis=0)

    q = split_heads(q2).astype(bf)                   # (H, Tq, dh)
    k = split_heads(kv2[:, :D]).astype(bf)           # (H, S,  dh)
    v = split_heads(kv2[:, D:]).astype(bf)           # (H, S,  dh)

    # --- multi-head self-attention (heads batched in one dot_general) --------
    scores = jnp.einsum('hqd,hkd->hqk', q, k,
                        preferred_element_type=jnp.float32)     # (H, Tq, S)
    scores = scores + bias_ref[0][None, :, :]        # additive key-padding bias

    mx = jnp.max(scores, axis=-1, keepdims=True)
    p = jnp.exp(scores - mx)
    denom = jnp.sum(p, axis=-1, keepdims=True)
    r = pl.reciprocal(denom, approx=True)            # EUP slot (~free)
    r = r * (2.0 - denom * r)                        # one Newton step -> exact
    attn = p * r                                     # (H, Tq, S)

    if maybe_attn_ref:                               # single all-heads store
        maybe_attn_ref[0][0] = attn.astype(maybe_attn_ref[0].dtype)

    ctx = jnp.einsum('hqk,hkd->hqd', attn.astype(bf), v,
                     preferred_element_type=jnp.float32)        # (H, Tq, dh)

    # Re-pack heads lane-dense and contract (h, d) in ONE K=D MXU matmul.
    ctx_flat = jnp.concatenate([ctx[h] for h in range(H)], axis=-1)   # (Tq, D)
    attn_out = jnp.dot(ctx_flat.astype(bf), wo_ref[...],
                       preferred_element_type=jnp.float32)      # (Tq, D)

    inv_d = 1.0 / D

    def layer_norm(t, g_ref, b_ref):                 # two-pass statistics
        mu = jnp.sum(t, axis=-1, keepdims=True) * inv_d
        c = t - mu
        var = jnp.sum(c * c, axis=-1, keepdims=True) * inv_d
        return c * jax.lax.rsqrt(var + eps) * g_ref[...] + b_ref[...]

    # --- residual + LayerNorm 1 -----------------------------------------------
    x1 = layer_norm(xq + attn_out, g1_ref, bn1_ref)              # (Tq, D) f32
    x1b = x1.astype(bf)

    # --- feed-forward, tiled over dff with persistent f32 accumulator ---------
    dff = w1_ref.shape[1]
    acc = jnp.zeros((Tq, D), jnp.float32)
    for c0 in range(0, dff, ff_tile):                            # static chunks
        h1 = jnp.dot(x1b, w1_ref[:, c0:c0 + ff_tile],
                     preferred_element_type=jnp.float32)
        h1 = jnp.maximum(h1 + b1_ref[:, c0:c0 + ff_tile], 0.0).astype(bf)
        acc = acc + jnp.dot(h1, w2_ref[c0:c0 + ff_tile, :],
                            preferred_element_type=jnp.float32)
    ffn = acc + b2_ref[...]

    # --- residual + LayerNorm 2 ------------------------------------------------
    out_ref[0] = layer_norm(x1 + ffn, g2_ref, bn2_ref)


# ----------------------------------------------------------------------------
# Wrapper: weight packing (bf16, fused K|V, scale folded) + pallas_call
# ----------------------------------------------------------------------------
def encoder_layer(x, mask, params, *, nhead, eps=1e-5, with_attn=True,
                  attn_dtype=jnp.bfloat16, block_q=None):
    B, S, D = x.shape
    assert D % nhead == 0, "d_model must be divisible by nhead"
    H, dh = nhead, D // nhead
    dff = params["w1"].shape[1]
    bf = jnp.bfloat16

    # Query tile (folded into the matmul M dimension); full S for short seqs.
    if block_q is None:
        if S <= 256:
            block_q = S
        elif S % 256 == 0:
            block_q = 256
        elif S % 128 == 0:
            block_q = 128
        else:
            block_q = S
    assert S % block_q == 0
    n_q = S // block_q

    # dff chunk size for the in-kernel FFN accumulation loop.
    if dff <= 512:
        ff_tile = dff
    elif dff % 512 == 0:
        ff_tile = 512
    elif dff % 256 == 0:
        ff_tile = 256
    else:
        ff_tile = dff

    # --- weight packing (done once at load time in a real model) -------------
    scale = 1.0 / math.sqrt(dh)
    wq = (params["wq"] * scale).astype(bf)                       # (D, D), scale folded
    wkv = jnp.concatenate([params["wk"], params["wv"]], axis=1).astype(bf)  # (D, 2D)
    wo = params["wo"].astype(bf)                                 # (D, D)
    w1 = params["w1"].astype(bf)                                 # (D, dff)
    w2 = params["w2"].astype(bf)                                 # (dff, D)

    # additive key-padding bias: 0 where keep, -1e9 where pad
    bias = (mask.astype(jnp.float32) - 1.0) * 1e9                # (B, 1, S)

    # generation-aware scoped-VMEM limit (v7x ~64 MiB/core, v5e/v6e 128 MiB)
    try:
        vmem_cap = int(pltpu.get_tpu_info().vmem_capacity_bytes)
    except Exception:
        vmem_cap = 64 * 1024 * 1024
    vmem_limit = int(min(max(vmem_cap - (8 << 20), 32 << 20), 112 << 20))

    kernel = functools.partial(encoder_layer_kernel, nhead=H, dh=dh, eps=eps,
                               ff_tile=ff_tile)

    def wspec(shape):   # weights: constant across the grid -> single-buffered
        return pl.BlockSpec(shape, lambda b, qi, n=len(shape): (0,) * n,
                            pipeline_mode=pl.Buffered(1))

    in_specs = [
        pl.BlockSpec((1, block_q, D), lambda b, qi: (b, qi, 0)),  # x (query rows)
        pl.BlockSpec((1, S, D), lambda b, qi: (b, 0, 0)),         # x (all rows, K/V)
        pl.BlockSpec((1, 1, S), lambda b, qi: (b, 0, 0)),         # mask bias
        wspec((D, D)),            # Wq (scaled, bf16)
        wspec((D, 2 * D)),        # fused [Wk|Wv] (bf16)
        wspec((D, D)),            # Wo (bf16)
        wspec((1, D)), wspec((1, D)),      # norm1 gamma / beta
        wspec((1, D)), wspec((1, D)),      # norm2 gamma / beta
        wspec((D, dff)), wspec((1, dff)),  # FFN W1 / b1
        wspec((dff, D)), wspec((1, D)),    # FFN W2 / b2
    ]

    out_shape = [jax.ShapeDtypeStruct((B, S, D), jnp.float32)]
    out_specs = [pl.BlockSpec((1, block_q, D), lambda b, qi: (b, qi, 0))]
    if with_attn:
        out_shape.append(jax.ShapeDtypeStruct((B, H, S, S), attn_dtype))
        out_specs.append(pl.BlockSpec((1, H, block_q, S),
                                      lambda b, qi: (b, 0, qi, 0)))

    results = pl.pallas_call(
        kernel,
        out_shape=tuple(out_shape),
        grid=(B, n_q),
        in_specs=in_specs,
        out_specs=tuple(out_specs),
        compiler_params=pltpu.CompilerParams(
            dimension_semantics=("parallel", "parallel"),
            vmem_limit_bytes=vmem_limit),
    )(x, x, bias, wq, wkv, wo,
      params["g1"], params["bn1"], params["g2"], params["bn2"],
      w1, params["b1"], w2, params["b2"])

    if with_attn:
        return results            # (out, attn)
    return results[0]             # out only


# ----------------------------------------------------------------------------
# Pure-JAX f32 reference (matches PyTorch eval() semantics of EncoderLayer)
# ----------------------------------------------------------------------------
def encoder_layer_reference(x, mask, p, *, nhead, eps=1e-5):
    B, S, D = x.shape
    dh = D // nhead

    def split(t):
        return t.reshape(B, S, nhead, dh).transpose(0, 2, 1, 3)

    q, k, v = split(x @ p["wq"]), split(x @ p["wk"]), split(x @ p["wv"])
    scores = jnp.einsum('bhqd,bhkd->bhqk', q, k) / math.sqrt(dh)
    scores = jnp.where(mask[:, None, :, :] == 0.0, -1e9, scores)
    attn = jax.nn.softmax(scores, axis=-1)
    ctx = jnp.einsum('bhqk,bhkd->bhqd', attn, v)
    ctx = ctx.transpose(0, 2, 1, 3).reshape(B, S, D)
    attn_o = ctx @ p["wo"]

    def norm(t, g, b):
        mu = t.mean(-1, keepdims=True)
        var = ((t - mu) ** 2).mean(-1, keepdims=True)
        return (t - mu) * jax.lax.rsqrt(var + eps) * g + b

    x1 = norm(x + attn_o, p["g1"], p["bn1"])
    ffn = jnp.maximum(x1 @ p["w1"] + p["b1"], 0.0) @ p["w2"] + p["b2"]
    return norm(x1 + ffn, p["g2"], p["bn2"]), attn


# ----------------------------------------------------------------------------
if __name__ == "__main__":
    key = jax.random.PRNGKey(0)
    B, S, D, H, dff = 2, 8, 32, 4, 64
    n_pad = 2          # last two key positions of batch element 1 are padding

    ks = jax.random.split(key, 7)
    s_d, s_f = 1.0 / math.sqrt(D), 1.0 / math.sqrt(dff)
    params = dict(
        wq=jax.random.normal(ks[0], (D, D), jnp.float32) * s_d,
        wk=jax.random.normal(ks[1], (D, D), jnp.float32) * s_d,
        wv=jax.random.normal(ks[2], (D, D), jnp.float32) * s_d,
        wo=jax.random.normal(ks[3], (D, D), jnp.float32) * s_d,
        g1=jnp.ones((1, D), jnp.float32), bn1=jnp.zeros((1, D), jnp.float32),
        g2=jnp.ones((1, D), jnp.float32), bn2=jnp.zeros((1, D), jnp.float32),
        w1=jax.random.normal(ks[4], (D, dff), jnp.float32) * s_d,
        b1=jnp.zeros((1, dff), jnp.float32),
        w2=jax.random.normal(ks[5], (dff, D), jnp.float32) * s_f,
        b2=jnp.zeros((1, D), jnp.float32),
    )
    x = jax.random.normal(ks[6], (B, S, D), jnp.float32)
    mask = jnp.ones((B, 1, S), jnp.float32).at[1, :, S - n_pad:].set(0.0)

    out, attn = encoder_layer(x, mask, params, nhead=H)
    out, attn = jax.block_until_ready((out, attn))

    assert out.shape == (B, S, D), out.shape
    assert attn.shape == (B, H, S, S), attn.shape
    assert bool(jnp.all(jnp.isfinite(out))) and bool(jnp.all(jnp.isfinite(attn)))

    out_expect, attn_expect = encoder_layer_reference(x, mask, params, nhead=H)
    # loose tolerances: kernel uses bf16 MXU inputs and a bf16 attn writeback
    assert float(jnp.max(jnp.abs(attn.astype(jnp.float32) - attn_expect))) < 5e-2
    assert float(jnp.max(jnp.abs(out - out_expect))) < 2e-1

    # Stacked use: intermediate layers skip the dead attention-weights writeback.
    out2 = encoder_layer(out, mask, params, nhead=H, with_attn=False)
    out2 = jax.block_until_ready(out2)
    assert out2.shape == (B, S, D) and bool(jnp.all(jnp.isfinite(out2)))

    print("KERNEL_OK")
</pallas_src>

<mosaic_0001>
module attributes {stable_mosaic.version = 11 : i64} {
  func.func @encoder_layer_kernel(%arg0: i32, %arg1: i32, %arg2: memref<1x8x32xf32, #tpu.memory_space<vmem>>, %arg3: memref<1x8x32xf32, #tpu.memory_space<vmem>>, %arg4: memref<1x1x8xf32, #tpu.memory_space<vmem>>, %arg5: memref<32x32xbf16, #tpu.memory_space<vmem>>, %arg6: memref<32x64xbf16, #tpu.memory_space<vmem>>, %arg7: memref<32x32xbf16, #tpu.memory_space<vmem>>, %arg8: memref<1x32xf32, #tpu.memory_space<vmem>>, %arg9: memref<1x32xf32, #tpu.memory_space<vmem>>, %arg10: memref<1x32xf32, #tpu.memory_space<vmem>>, %arg11: memref<1x32xf32, #tpu.memory_space<vmem>>, %arg12: memref<32x64xbf16, #tpu.memory_space<vmem>>, %arg13: memref<1x64xf32, #tpu.memory_space<vmem>>, %arg14: memref<64x32xbf16, #tpu.memory_space<vmem>>, %arg15: memref<1x32xf32, #tpu.memory_space<vmem>>, %arg16: memref<1x8x32xf32, #tpu.memory_space<vmem>>, %arg17: memref<1x4x8x8xbf16, #tpu.memory_space<vmem>>) attributes {dimension_semantics = [#tpu.dimension_semantics<parallel>, #tpu.dimension_semantics<parallel>], iteration_bounds = array<i64: 2, 1>, scalar_prefetch = 0 : i64, scratch_operands = 0 : i64, tpu.core_type = #tpu.core_type<tc>, window_params = [{transform_indices = @transform_0, window_bounds = array<i64: 1, 8, 32>}, {transform_indices = @transform_1, window_bounds = array<i64: 1, 8, 32>}, {transform_indices = @transform_2, window_bounds = array<i64: 1, 1, 8>}, {pipeline_mode = #tpu.pipeline_mode<synchronous>, transform_indices = @transform_3, window_bounds = array<i64: 32, 32>}, {pipeline_mode = #tpu.pipeline_mode<synchronous>, transform_indices = @transform_4, window_bounds = array<i64: 32, 64>}, {pipeline_mode = #tpu.pipeline_mode<synchronous>, transform_indices = @transform_5, window_bounds = array<i64: 32, 32>}, {pipeline_mode = #tpu.pipeline_mode<synchronous>, transform_indices = @transform_6, window_bounds = array<i64: 1, 32>}, {pipeline_mode = #tpu.pipeline_mode<synchronous>, transform_indices = @transform_7, window_bounds = array<i64: 1, 32>}, {pipeline_mode = #tpu.pipeline_mode<synchronous>, transform_indices = @transform_8, window_bounds = array<i64: 1, 32>}, {pipeline_mode = #tpu.pipeline_mode<synchronous>, transform_indices = @transform_9, window_bounds = array<i64: 1, 32>}, {pipeline_mode = #tpu.pipeline_mode<synchronous>, transform_indices = @transform_10, window_bounds = array<i64: 32, 64>}, {pipeline_mode = #tpu.pipeline_mode<synchronous>, transform_indices = @transform_11, window_bounds = array<i64: 1, 64>}, {pipeline_mode = #tpu.pipeline_mode<synchronous>, transform_indices = @transform_12, window_bounds = array<i64: 64, 32>}, {pipeline_mode = #tpu.pipeline_mode<synchronous>, transform_indices = @transform_13, window_bounds = array<i64: 1, 32>}, {transform_indices = @transform_14, window_bounds = array<i64: 1, 8, 32>}, {transform_indices = @transform_15, window_bounds = array<i64: 1, 4, 8, 8>}]} {
    %c0 = arith.constant 0 : index
    %c0_0 = arith.constant 0 : index
    %c0_1 = arith.constant 0 : index
    %0 = vector.load %arg2[%c0, %c0_0, %c0_1] : memref<1x8x32xf32, #tpu.memory_space<vmem>>, vector<1x8x32xf32>
    %1 = vector.shape_cast %0 : vector<1x8x32xf32> to vector<8x32xf32>
    %c0_2 = arith.constant 0 : index
    %c0_3 = arith.constant 0 : index
    %c0_4 = arith.constant 0 : index
    %2 = vector.load %arg3[%c0_2, %c0_3, %c0_4] : memref<1x8x32xf32, #tpu.memory_space<vmem>>, vector<1x8x32xf32>
    %3 = vector.shape_cast %2 : vector<1x8x32xf32> to vector<8x32xf32>
    %4 = arith.truncf %1 : vector<8x32xf32> to vector<8x32xbf16>
    %c0_5 = arith.constant 0 : index
    %c0_6 = arith.constant 0 : index
    %5 = vector.load %arg5[%c0_5, %c0_6] : memref<32x32xbf16, #tpu.memory_space<vmem>>, vector<32x32xbf16>
    %cst = arith.constant dense<0.000000e+00> : vector<8x32xf32>
    %6 = tpu.matmul %4, %5, %cst {dimension_numbers = #tpu.dot_dimension_numbers<[1], [0], [0], [1], [0, 0, 1, 1], [], []>} : vector<8x32xbf16>, vector<32x32xbf16>, vector<8x32xf32> -> vector<8x32xf32>
    %7 = arith.truncf %3 : vector<8x32xf32> to vector<8x32xbf16>
    %c0_7 = arith.constant 0 : index
    %c0_8 = arith.constant 0 : index
    %8 = vector.load %arg6[%c0_7, %c0_8] : memref<32x64xbf16, #tpu.memory_space<vmem>>, vector<32x64xbf16>
    %cst_9 = arith.constant dense<0.000000e+00> : vector<8x64xf32>
    %9 = tpu.matmul %7, %8, %cst_9 {dimension_numbers = #tpu.dot_dimension_numbers<[1], [0], [0], [1], [0, 0, 1, 1], [], []>} : vector<8x32xbf16>, vector<32x64xbf16>, vector<8x64xf32> -> vector<8x64xf32>
    %10 = vector.extract_strided_slice %6 {offsets = [0, 0], sizes = [8, 8], strides = [1, 1]} : vector<8x32xf32> to vector<8x8xf32>
    %11 = vector.extract_strided_slice %6 {offsets = [0, 8], sizes = [8, 8], strides = [1, 1]} : vector<8x32xf32> to vector<8x8xf32>
    %12 = vector.extract_strided_slice %6 {offsets = [0, 16], sizes = [8, 8], strides = [1, 1]} : vector<8x32xf32> to vector<8x8xf32>
    %13 = vector.extract_strided_slice %6 {offsets = [0, 24], sizes = [8, 8], strides = [1, 1]} : vector<8x32xf32> to vector<8x8xf32>
    %14 = vector.shape_cast %10 : vector<8x8xf32> to vector<1x8x8xf32>
    %15 = vector.shape_cast %11 : vector<8x8xf32> to vector<1x8x8xf32>
    %16 = vector.shape_cast %12 : vector<8x8xf32> to vector<1x8x8xf32>
    %17 = vector.shape_cast %13 : vector<8x8xf32> to vector<1x8x8xf32>
    %18 = tpu.concatenate %14, %15, %16, %17 in 0 : vector<1x8x8xf32>, vector<1x8x8xf32>, vector<1x8x8xf32>, vector<1x8x8xf32> -> vector<4x8x8xf32>
    %19 = arith.truncf %18 : vector<4x8x8xf32> to vector<4x8x8xbf16>
    %20 = vector.extract_strided_slice %9 {offsets = [0, 0], sizes = [8, 32], strides = [1, 1]} : vector<8x64xf32> to vector<8x32xf32>
    %21 = vector.extract_strided_slice %20 {offsets = [0, 0], sizes = [8, 8], strides = [1, 1]} : vector<8x32xf32> to vector<8x8xf32>
    %22 = vector.extract_strided_slice %20 {offsets = [0, 8], sizes = [8, 8], strides = [1, 1]} : vector<8x32xf32> to vector<8x8xf32>
    %23 = vector.extract_strided_slice %20 {offsets = [0, 16], sizes = [8, 8], strides = [1, 1]} : vector<8x32xf32> to vector<8x8xf32>
    %24 = vector.extract_strided_slice %20 {offsets = [0, 24], sizes = [8, 8], strides = [1, 1]} : vector<8x32xf32> to vector<8x8xf32>
    %25 = vector.shape_cast %21 : vector<8x8xf32> to vector<1x8x8xf32>
    %26 = vector.shape_cast %22 : vector<8x8xf32> to vector<1x8x8xf32>
    %27 = vector.shape_cast %23 : vector<8x8xf32> to vector<1x8x8xf32>
    %28 = vector.shape_cast %24 : vector<8x8xf32> to vector<1x8x8xf32>
    %29 = tpu.concatenate %25, %26, %27, %28 in 0 : vector<1x8x8xf32>, vector<1x8x8xf32>, vector<1x8x8xf32>, vector<1x8x8xf32> -> vector<4x8x8xf32>
    %30 = arith.truncf %29 : vector<4x8x8xf32> to vector<4x8x8xbf16>
    %31 = vector.extract_strided_slice %9 {offsets = [0, 32], sizes = [8, 32], strides = [1, 1]} : vector<8x64xf32> to vector<8x32xf32>
    %32 = vector.extract_strided_slice %31 {offsets = [0, 0], sizes = [8, 8], strides = [1, 1]} : vector<8x32xf32> to vector<8x8xf32>
    %33 = vector.extract_strided_slice %31 {offsets = [0, 8], sizes = [8, 8], strides = [1, 1]} : vector<8x32xf32> to vector<8x8xf32>
    %34 = vector.extract_strided_slice %31 {offsets = [0, 16], sizes = [8, 8], strides = [1, 1]} : vector<8x32xf32> to vector<8x8xf32>
    %35 = vector.extract_strided_slice %31 {offsets = [0, 24], sizes = [8, 8], strides = [1, 1]} : vector<8x32xf32> to vector<8x8xf32>
    %36 = vector.shape_cast %32 : vector<8x8xf32> to vector<1x8x8xf32>
    %37 = vector.shape_cast %33 : vector<8x8xf32> to vector<1x8x8xf32>
    %38 = vector.shape_cast %34 : vector<8x8xf32> to vector<1x8x8xf32>
    %39 = vector.shape_cast %35 : vector<8x8xf32> to vector<1x8x8xf32>
    %40 = tpu.concatenate %36, %37, %38, %39 in 0 : vector<1x8x8xf32>, vector<1x8x8xf32>, vector<1x8x8xf32>, vector<1x8x8xf32> -> vector<4x8x8xf32>
    %41 = arith.truncf %40 : vector<4x8x8xf32> to vector<4x8x8xbf16>
    "tpu.trace_start"() <{level = 10 : i32, message = "hqd,hkd->hqk"}> : () -> ()
    %cst_10 = arith.constant dense<0.000000e+00> : vector<4x8x8xf32>
    %42 = tpu.matmul %19, %30, %cst_10 {dimension_numbers = #tpu.dot_dimension_numbers<[2], [2], [1], [1], [0, 0, 0, 1, 1, 1], [0], [0]>} : vector<4x8x8xbf16>, vector<4x8x8xbf16>, vector<4x8x8xf32> -> vector<4x8x8xf32>
    "tpu.trace_stop"() : () -> ()
    %c0_11 = arith.constant 0 : index
    %c0_12 = arith.constant 0 : index
    %c0_13 = arith.constant 0 : index
    %43 = vector.load %arg4[%c0_11, %c0_12, %c0_13] : memref<1x1x8xf32, #tpu.memory_space<vmem>>, vector<1x1x8xf32>
    %44 = vector.shape_cast %43 : vector<1x1x8xf32> to vector<1x8xf32>
    %45 = vector.shape_cast %44 : vector<1x8xf32> to vector<1x1x8xf32>
    %46 = vector.broadcast %45 : vector<1x1x8xf32> to vector<4x8x8xf32>
    %47 = arith.addf %42, %46 : vector<4x8x8xf32>
    %cst_14 = arith.constant dense<0xFF800000> : vector<4x8xf32>
    %48 = vector.multi_reduction <maximumf>, %47, %cst_14 [2] : vector<4x8x8xf32> to vector<4x8xf32>
    %49 = vector.shape_cast %48 : vector<4x8xf32> to vector<4x8x1xf32>
    %50 = vector.broadcast %49 : vector<4x8x1xf32> to vector<4x8x8xf32>
    %51 = arith.subf %47, %50 : vector<4x8x8xf32>
    %52 = math.exp %51 : vector<4x8x8xf32>
    %cst_15 = arith.constant dense<0.000000e+00> : vector<4x8xf32>
    %53 = vector.multi_reduction <add>, %52, %cst_15 [2] : vector<4x8x8xf32> to vector<4x8xf32>
    %54 = vector.shape_cast %53 : vector<4x8xf32> to vector<4x8x1xf32>
    %55 = tpu.reciprocal %54 {approx = true} : vector<4x8x1xf32> -> vector<4x8x1xf32>
    %56 = arith.mulf %54, %55 : vector<4x8x1xf32>
    %cst_16 = arith.constant 2.000000e+00 : f32
    %57 = vector.broadcast %cst_16 : f32 to vector<4x8x1xf32>
    %58 = arith.subf %57, %56 : vector<4x8x1xf32>
    %59 = arith.mulf %55, %58 : vector<4x8x1xf32>
    %60 = vector.broadcast %59 : vector<4x8x1xf32> to vector<4x8x8xf32>
    %61 = arith.mulf %52, %60 : vector<4x8x8xf32>
    %62 = arith.truncf %61 : vector<4x8x8xf32> to vector<4x8x8xbf16>
    %c0_17 = arith.constant 0 : index
    %c0_18 = arith.constant 0 : index
    %c0_19 = arith.constant 0 : index
    %c0_20 = arith.constant 0 : index
    %63 = vector.load %arg17[%c0_17, %c0_18, %c0_19, %c0_20] : memref<1x4x8x8xbf16, #tpu.memory_space<vmem>>, vector<1x4x8x8xbf16>
    %64 = vector.shape_cast %63 : vector<1x4x8x8xbf16> to vector<4x8x8xbf16>
    %65 = vector.shape_cast %62 : vector<4x8x8xbf16> to vector<1x4x8x8xbf16>
    tpu.vector_store %arg17[%c0_17, %c0_18, %c0_19, %c0_20], %65 {strides = array<i32>} : memref<1x4x8x8xbf16, #tpu.memory_space<vmem>>, vector<1x4x8x8xbf16>,
    %66 = arith.truncf %61 : vector<4x8x8xf32> to vector<4x8x8xbf16>
    "tpu.trace_start"() <{level = 10 : i32, message = "hqk,hkd->hqd"}> : () -> ()
    %cst_21 = arith.constant dense<0.000000e+00> : vector<4x8x8xf32>
    %67 = tpu.matmul %66, %41, %cst_21 {dimension_numbers = #tpu.dot_dimension_numbers<[2], [1], [1], [2], [0, 0, 0, 1, 1, 2], [0], [0]>} : vector<4x8x8xbf16>, vector<4x8x8xbf16>, vector<4x8x8xf32> -> vector<4x8x8xf32>
    "tpu.trace_stop"() : () -> ()
    %68 = vector.extract_strided_slice %67 {offsets = [0, 0, 0], sizes = [1, 8, 8], strides = [1, 1, 1]} : vector<4x8x8xf32> to vector<1x8x8xf32>
    %69 = vector.shape_cast %68 : vector<1x8x8xf32> to vector<8x8xf32>
    %70 = vector.extract_strided_slice %67 {offsets = [1, 0, 0], sizes = [1, 8, 8], strides = [1, 1, 1]} : vector<4x8x8xf32> to vector<1x8x8xf32>
    %71 = vector.shape_cast %70 : vector<1x8x8xf32> to vector<8x8xf32>
    %72 = vector.extract_strided_slice %67 {offsets = [2, 0, 0], sizes = [1, 8, 8], strides = [1, 1, 1]} : vector<4x8x8xf32> to vector<1x8x8xf32>
    %73 = vector.shape_cast %72 : vector<1x8x8xf32> to vector<8x8xf32>
    %74 = vector.extract_strided_slice %67 {offsets = [3, 0, 0], sizes = [1, 8, 8], strides = [1, 1, 1]} : vector<4x8x8xf32> to vector<1x8x8xf32>
    %75 = vector.shape_cast %74 : vector<1x8x8xf32> to vector<8x8xf32>
    %76 = tpu.concatenate %69, %71, %73, %75 in 1 : vector<8x8xf32>, vector<8x8xf32>, vector<8x8xf32>, vector<8x8xf32> -> vector<8x32xf32>
    %77 = arith.truncf %76 : vector<8x32xf32> to vector<8x32xbf16>
    %c0_22 = arith.constant 0 : index
    %c0_23 = arith.constant 0 : index
    %78 = vector.load %arg7[%c0_22, %c0_23] : memref<32x32xbf16, #tpu.memory_space<vmem>>, vector<32x32xbf16>
    %cst_24 = arith.constant dense<0.000000e+00> : vector<8x32xf32>
    %79 = tpu.matmul %77, %78, %cst_24 {dimension_numbers = #tpu.dot_dimension_numbers<[1], [0], [0], [1], [0, 0, 1, 1], [], []>} : vector<8x32xbf16>, vector<32x32xbf16>, vector<8x32xf32> -> vector<8x32xf32>
    %80 = arith.addf %1, %79 : vector<8x32xf32>
    %cst_25 = arith.constant dense<0.000000e+00> : vector<8xf32>
    %81 = vector.multi_reduction <add>, %80, %cst_25 [1] : vector<8x32xf32> to vector<8xf32>
    %82 = vector.shape_cast %81 : vector<8xf32> to vector<8x1xf32>
    %cst_26 = arith.constant 3.125000e-02 : f32
    %83 = vector.broadcast %cst_26 : f32 to vector<8x1xf32>
    %84 = arith.mulf %82, %83 : vector<8x1xf32>
    %85 = vector.broadcast %84 : vector<8x1xf32> to vector<8x32xf32>
    %86 = arith.subf %80, %85 : vector<8x32xf32>
    %87 = arith.mulf %86, %86 : vector<8x32xf32>
    %cst_27 = arith.constant dense<0.000000e+00> : vector<8xf32>
    %88 = vector.multi_reduction <add>, %87, %cst_27 [1] : vector<8x32xf32> to vector<8xf32>
    %89 = vector.shape_cast %88 : vector<8xf32> to vector<8x1xf32>
    %cst_28 = arith.constant 3.125000e-02 : f32
    %90 = vector.broadcast %cst_28 : f32 to vector<8x1xf32>
    %91 = arith.mulf %89, %90 : vector<8x1xf32>
    %cst_29 = arith.constant 9.99999974E-6 : f32
    %92 = vector.broadcast %cst_29 : f32 to vector<8x1xf32>
    %93 = arith.addf %91, %92 : vector<8x1xf32>
    %94 = math.rsqrt %93 : vector<8x1xf32>
    %95 = vector.broadcast %94 : vector<8x1xf32> to vector<8x32xf32>
    %96 = arith.mulf %86, %95 : vector<8x32xf32>
    %c0_30 = arith.constant 0 : index
    %c0_31 = arith.constant 0 : index
    %97 = vector.load %arg8[%c0_30, %c0_31] : memref<1x32xf32, #tpu.memory_space<vmem>>, vector<1x32xf32>
    %98 = vector.broadcast %97 : vector<1x32xf32> to vector<8x32xf32>
    %99 = arith.mulf %96, %98 : vector<8x32xf32>
    %c0_32 = arith.constant 0 : index
    %c0_33 = arith.constant 0 : index
    %100 = vector.load %arg9[%c0_32, %c0_33] : memref<1x32xf32, #tpu.memory_space<vmem>>, vector<1x32xf32>
    %101 = vector.broadcast %100 : vector<1x32xf32> to vector<8x32xf32>
    %102 = arith.addf %99, %101 : vector<8x32xf32>
    %103 = arith.truncf %102 : vector<8x32xf32> to vector<8x32xbf16>
    %cst_34 = arith.constant 0.000000e+00 : f32
    %104 = vector.broadcast %cst_34 : f32 to vector<8x32xf32>
    %c0_35 = arith.constant 0 : index
    %c0_36 = arith.constant 0 : index
    %105 = vector.load %arg12[%c0_35, %c0_36] : memref<32x64xbf16, #tpu.memory_space<vmem>>, vector<32x64xbf16>
    %cst_37 = arith.constant dense<0.000000e+00> : vector<8x64xf32>
    %106 = tpu.matmul %103, %105, %cst_37 {dimension_numbers = #tpu.dot_dimension_numbers<[1], [0], [0], [1], [0, 0, 1, 1], [], []>} : vector<8x32xbf16>, vector<32x64xbf16>, vector<8x64xf32> -> vector<8x64xf32>
    %c0_38 = arith.constant 0 : index
    %c0_39 = arith.constant 0 : index
    %107 = vector.load %arg13[%c0_38, %c0_39] : memref<1x64xf32, #tpu.memory_space<vmem>>, vector<1x64xf32>
    %108 = vector.broadcast %107 : vector<1x64xf32> to vector<8x64xf32>
    %109 = arith.addf %106, %108 : vector<8x64xf32>
    %cst_40 = arith.constant 0.000000e+00 : f32
    %110 = vector.broadcast %cst_40 : f32 to vector<8x64xf32>
    %111 = arith.maximumf %109, %110 : vector<8x64xf32>
    %112 = arith.truncf %111 : vector<8x64xf32> to vector<8x64xbf16>
    %c0_41 = arith.constant 0 : index
    %c0_42 = arith.constant 0 : index
    %113 = vector.load %arg14[%c0_41, %c0_42] : memref<64x32xbf16, #tpu.memory_space<vmem>>, vector<64x32xbf16>
    %cst_43 = arith.constant dense<0.000000e+00> : vector<8x32xf32>
    %114 = tpu.matmul %112, %113, %cst_43 {dimension_numbers = #tpu.dot_dimension_numbers<[1], [0], [0], [1], [0, 0, 1, 1], [], []>} : vector<8x64xbf16>, vector<64x32xbf16>, vector<8x32xf32> -> vector<8x32xf32>
    %115 = arith.addf %104, %114 : vector<8x32xf32>
    %c0_44 = arith.constant 0 : index
    %c0_45 = arith.constant 0 : index
    %116 = vector.load %arg15[%c0_44, %c0_45] : memref<1x32xf32, #tpu.memory_space<vmem>>, vector<1x32xf32>
    %117 = vector.broadcast %116 : vector<1x32xf32> to vector<8x32xf32>
    %118 = arith.addf %115, %117 : vector<8x32xf32>
    %119 = arith.addf %102, %118 : vector<8x32xf32>
    %cst_46 = arith.constant dense<0.000000e+00> : vector<8xf32>
    %120 = vector.multi_reduction <add>, %119, %cst_46 [1] : vector<8x32xf32> to vector<8xf32>
    %121 = vector.shape_cast %120 : vector<8xf32> to vector<8x1xf32>
    %cst_47 = arith.constant 3.125000e-02 : f32
    %122 = vector.broadcast %cst_47 : f32 to vector<8x1xf32>
    %123 = arith.mulf %121, %122 : vector<8x1xf32>
    %124 = vector.broadcast %123 : vector<8x1xf32> to vector<8x32xf32>
    %125 = arith.subf %119, %124 : vector<8x32xf32>
    %126 = arith.mulf %125, %125 : vector<8x32xf32>
    %cst_48 = arith.constant dense<0.000000e+00> : vector<8xf32>
    %127 = vector.multi_reduction <add>, %126, %cst_48 [1] : vector<8x32xf32> to vector<8xf32>
    %128 = vector.shape_cast %127 : vector<8xf32> to vector<8x1xf32>
    %cst_49 = arith.constant 3.125000e-02 : f32
    %129 = vector.broadcast %cst_49 : f32 to vector<8x1xf32>
    %130 = arith.mulf %128, %129 : vector<8x1xf32>
    %cst_50 = arith.constant 9.99999974E-6 : f32
    %131 = vector.broadcast %cst_50 : f32 to vector<8x1xf32>
    %132 = arith.addf %130, %131 : vector<8x1xf32>
    %133 = math.rsqrt %132 : vector<8x1xf32>
    %134 = vector.broadcast %133 : vector<8x1xf32> to vector<8x32xf32>
    %135 = arith.mulf %125, %134 : vector<8x32xf32>
    %c0_51 = arith.constant 0 : index
    %c0_52 = arith.constant 0 : index
    %136 = vector.load %arg10[%c0_51, %c0_52] : memref<1x32xf32, #tpu.memory_space<vmem>>, vector<1x32xf32>
    %137 = vector.broadcast %136 : vector<1x32xf32> to vector<8x32xf32>
    %138 = arith.mulf %135, %137 : vector<8x32xf32>
    %c0_53 = arith.constant 0 : index
    %c0_54 = arith.constant 0 : index
    %139 = vector.load %arg11[%c0_53, %c0_54] : memref<1x32xf32, #tpu.memory_space<vmem>>, vector<1x32xf32>
    %140 = vector.broadcast %139 : vector<1x32xf32> to vector<8x32xf32>
    %141 = arith.addf %138, %140 : vector<8x32xf32>
    %c0_55 = arith.constant 0 : index
    %c0_56 = arith.constant 0 : index
    %c0_57 = arith.constant 0 : index
    %142 = vector.load %arg16[%c0_55, %c0_56, %c0_57] : memref<1x8x32xf32, #tpu.memory_space<vmem>>, vector<1x8x32xf32>
    %143 = vector.shape_cast %142 : vector<1x8x32xf32> to vector<8x32xf32>
    %144 = vector.shape_cast %141 : vector<8x32xf32> to vector<1x8x32xf32>
    tpu.vector_store %arg16[%c0_55, %c0_56, %c0_57], %144 {strides = array<i32>} : memref<1x8x32xf32, #tpu.memory_space<vmem>>, vector<1x8x32xf32>,
    return
  }
  func.func @transform_0(%arg0: i32, %arg1: i32) -> (i32, i32, i32) {
    %c0_i32 = arith.constant 0 : i32
    %c0_i32_0 = arith.constant 0 : i32
    return %arg0, %arg1, %c0_i32 : i32, i32, i32
  }
  func.func @transform_1(%arg0: i32, %arg1: i32) -> (i32, i32, i32) {
    %c0_i32 = arith.constant 0 : i32
    %c0_i32_0 = arith.constant 0 : i32
    %c0_i32_1 = arith.constant 0 : i32
    return %arg0, %c0_i32, %c0_i32_0 : i32, i32, i32
  }
  func.func @transform_2(%arg0: i32, %arg1: i32) -> (i32, i32, i32) {
    %c0_i32 = arith.constant 0 : i32
    %c0_i32_0 = arith.constant 0 : i32
    %c0_i32_1 = arith.constant 0 : i32
    return %arg0, %c0_i32, %c0_i32_0 : i32, i32, i32
  }
  func.func @transform_3(%arg0: i32, %arg1: i32) -> (i32, i32) {
    %c0_i32 = arith.constant 0 : i32
    %c0_i32_0 = arith.constant 0 : i32
    %c0_i32_1 = arith.constant 0 : i32
    return %c0_i32, %c0_i32_0 : i32, i32
  }
  func.func @transform_4(%arg0: i32, %arg1: i32) -> (i32, i32) {
    %c0_i32 = arith.constant 0 : i32
    %c0_i32_0 = arith.constant 0 : i32
    %c0_i32_1 = arith.constant 0 : i32
    return %c0_i32, %c0_i32_0 : i32, i32
  }
  func.func @transform_5(%arg0: i32, %arg1: i32) -> (i32, i32) {
    %c0_i32 = arith.constant 0 : i32
    %c0_i32_0 = arith.constant 0 : i32
    %c0_i32_1 = arith.constant 0 : i32
    return %c0_i32, %c0_i32_0 : i32, i32
  }
  func.func @transform_6(%arg0: i32, %arg1: i32) -> (i32, i32) {
    %c0_i32 = arith.constant 0 : i32
    %c0_i32_0 = arith.constant 0 : i32
    %c0_i32_1 = arith.constant 0 : i32
    return %c0_i32, %c0_i32_0 : i32, i32
  }
  func.func @transform_7(%arg0: i32, %arg1: i32) -> (i32, i32) {
    %c0_i32 = arith.constant 0 : i32
    %c0_i32_0 = arith.constant 0 : i32
    %c0_i32_1 = arith.constant 0 : i32
    return %c0_i32, %c0_i32_0 : i32, i32
  }
  func.func @transform_8(%arg0: i32, %arg1: i32) -> (i32, i32) {
    %c0_i32 = arith.constant 0 : i32
    %c0_i32_0 = arith.constant 0 : i32
    %c0_i32_1 = arith.constant 0 : i32
    return %c0_i32, %c0_i32_0 : i32, i32
  }
  func.func @transform_9(%arg0: i32, %arg1: i32) -> (i32, i32) {
    %c0_i32 = arith.constant 0 : i32
    %c0_i32_0 = arith.constant 0 : i32
    %c0_i32_1 = arith.constant 0 : i32
    return %c0_i32, %c0_i32_0 : i32, i32
  }
  func.func @transform_10(%arg0: i32, %arg1: i32) -> (i32, i32) {
    %c0_i32 = arith.constant 0 : i32
    %c0_i32_0 = arith.constant 0 : i32
    %c0_i32_1 = arith.constant 0 : i32
    return %c0_i32, %c0_i32_0 : i32, i32
  }
  func.func @transform_11(%arg0: i32, %arg1: i32) -> (i32, i32) {
    %c0_i32 = arith.constant 0 : i32
    %c0_i32_0 = arith.constant 0 : i32
    %c0_i32_1 = arith.constant 0 : i32
    return %c0_i32, %c0_i32_0 : i32, i32
  }
  func.func @transform_12(%arg0: i32, %arg1: i32) -> (i32, i32) {
    %c0_i32 = arith.constant 0 : i32
    %c0_i32_0 = arith.constant 0 : i32
    %c0_i32_1 = arith.constant 0 : i32
    return %c0_i32, %c0_i32_0 : i32, i32
  }
  func.func @transform_13(%arg0: i32, %arg1: i32) -> (i32, i32) {
    %c0_i32 = arith.constant 0 : i32
    %c0_i32_0 = arith.constant 0 : i32
    %c0_i32_1 = arith.constant 0 : i32
    return %c0_i32, %c0_i32_0 : i32, i32
  }
  func.func @transform_14(%arg0: i32, %arg1: i32) -> (i32, i32, i32) {
    %c0_i32 = arith.constant 0 : i32
    %c0_i32_0 = arith.constant 0 : i32
    return %arg0, %arg1, %c0_i32 : i32, i32, i32
  }
  func.func @transform_15(%arg0: i32, %arg1: i32) -> (i32, i32, i32, i32) {
    %c0_i32 = arith.constant 0 : i32
    %c0_i32_0 = arith.constant 0 : i32
    %c0_i32_1 = arith.constant 0 : i32
    return %arg0, %c0_i32, %arg1, %c0_i32_0 : i32, i32, i32, i32
  }
}

</mosaic_0001>

<llo_original>
// kernel: tpu_custom_call.1
$region0: #{tpu_custom_call.1}
  #allocation0 [shape = 'u32[]', space=smem, size = 0x4, offset = 0x4, fixed_abs, tag = 'smem constant byte address 0x4 - core index']
  #allocation1 [shape = 'u32[144,128]{1,0:T(1,128)}', space=vmem, size = 0x12000, scoped, tag = 'internal scratch']
  %s0 = inlined_call_operand.vmem [shape: f32[2,8,32], index: 0, kind: input, shape index: {}]
  %s1 = inlined_call_operand.vmem [shape: f32[2,8,32], index: 1, kind: input, shape index: {}]
  %s2 = inlined_call_operand.vmem [shape: f32[2,1,8], index: 2, kind: input, shape index: {}]
  %s3 = inlined_call_operand.vmem [shape: bf16[32,32], index: 3, kind: input, shape index: {}]
  %s4 = inlined_call_operand.hbm [shape: bf16[32,64], index: 4, kind: input, shape index: {}]
  %s5 = inlined_call_operand.hbm [shape: bf16[32,32], index: 5, kind: input, shape index: {}]
  %s6 = inlined_call_operand.hbm [shape: f32[1,32], index: 6, kind: input, shape index: {}]
  %s7 = inlined_call_operand.hbm [shape: f32[1,32], index: 7, kind: input, shape index: {}]
  %s8 = inlined_call_operand.hbm [shape: f32[1,32], index: 8, kind: input, shape index: {}]
  %s9 = inlined_call_operand.hbm [shape: f32[1,32], index: 9, kind: input, shape index: {}]
  %s10 = inlined_call_operand.vmem [shape: bf16[32,64], index: 10, kind: input, shape index: {}]
  %s11 = inlined_call_operand.vmem [shape: f32[1,64], index: 11, kind: input, shape index: {}]
  %s12 = inlined_call_operand.vmem [shape: bf16[64,32], index: 12, kind: input, shape index: {}]
  %s13 = inlined_call_operand.vmem [shape: f32[1,32], index: 13, kind: input, shape index: {}]
  %s14 = inlined_call_operand.hbm [shape: f32[2,8,32], index: 14, kind: output, shape index: {0}]
  %s15 = inlined_call_operand.hbm [shape: bf16[2,4,8,8], index: 15, kind: output, shape index: {1}]
  %16 = xla_tuple %s14, %s15
  %s17 = sld [smem:[#allocation0]]
  $region121: #{tpu_custom_call.1} parent=0
    _
  %s19 = ssub.s32 1, %s17
  %s20 = scalar_select 0, %s19, %s17
  $region1: #{tpu_custom_call.1} parent=0
    #allocation2 [shape = 'u8[8192]{0}', space=vmem, size = 0x2000, scoped, tag = 'input window, operand 4, single buffered']
    #allocation3 [shape = 's32[2]{0}', space=sflag, size = 0x8, scoped, tag = 'scoped memory for tpu_custom_call.1']
    #allocation4 [shape = 's32[2]{0}', space=sflag, size = 0x8, scoped, tag = 'scoped memory for tpu_custom_call.1']
    #allocation5 [shape = 'u8[8192]{0}', space=vmem, size = 0x2000, scoped, tag = 'input window, operand 5, single buffered']
    #allocation6 [shape = 's32[1]{0}', space=sflag, size = 0x4, scoped, tag = 'scoped memory for tpu_custom_call.1']
    #allocation7 [shape = 'u8[512]{0}', space=vmem, size = 0x400, scoped, tag = 'input window, operand 6, single buffered']
    #allocation8 [shape = 'u8[512]{0}', space=vmem, size = 0x400, scoped, tag = 'input window, operand 7, single buffered']
    #allocation9 [shape = 's32[1]{0}', space=sflag, size = 0x4, scoped, tag = 'scoped memory for tpu_custom_call.1']
    #allocation10 [shape = 'u8[512]{0}', space=vmem, size = 0x400, scoped, tag = 'input window, operand 8, single buffered']
    #allocation11 [shape = 'u8[512]{0}', space=vmem, size = 0x400, scoped, tag = 'input window, operand 9, single buffered']
    #allocation12 [shape = 's32[1]{0}', space=sflag, size = 0x4, scoped, tag = 'scoped memory for tpu_custom_call.1']
    #allocation13 [shape = 'u8[8192]{0}', space=vmem, size = 0x2000, scoped, tag = 'output window, operand 0']
    #allocation14 [shape = 'u8[16384]{0}', space=vmem, size = 0x4000, scoped, tag = 'output window, operand 1']
    #allocation15 [shape = 's32[2]{0}', space=sflag, size = 0x8, scoped, tag = 'scoped memory for tpu_custom_call.1']
    %21 = vsyncpa [#allocation3], 0
    %22 = vsyncpa [#allocation6], 0
    %23 = vsyncpa [#allocation9], 0
    %24 = vsyncpa [#allocation12], 0
    %25 = vsyncpa [#allocation4], 0
    %s26 = scalar_lea.sflag [#allocation4], 1
    %27 = vsyncpa %s26, 0
    %28 = vsyncpa [#allocation15], 0
    %s29 = scalar_lea.sflag [#allocation15], 1
    %30 = vsyncpa %s29, 0
    loop: start=0, step=1, limit=4
    $region2: #{tpu_custom_call.1} parent=1 // loop_pre_header
      _
    $region3: #{tpu_custom_call.1} parent=1 // loop_header
      %s32 = sphi 0, %s36
      %p33 = scmp.ge.s32.totalorder %s32, 4
      %s39 = sphi 0, %s51
      %s40 = sphi 0, %s47
      %s41 = sphi 0, %s39
      %s42 = sphi 0, %s40
      %s43 = sphi 0, %s41
      %s44 = sphi 0, %s42
      %s56 = sphi 0, %s58
      %s59 = sphi 0, %s56
      %s60 = sphi 0, %s59
      %s76 = sphi 0, %s60
      %s82 = sphi 0, %s84
      %s85 = sphi 0, %s82
      %s86 = sphi 0, %s85
      %s102 = sphi 0, %s86
      %s108 = sphi 0, %s110
      %s111 = sphi 0, %s108
      %s112 = sphi 0, %s111
      %s128 = sphi 0, %s112
      %s132 = sphi 0, %s132
      %s134 = sphi 0, %s132
      %s135 = sphi 0, %s134
      %s149 = sphi 0, %s135
      %s153 = sphi 0, %s153
      %s155 = sphi 0, %s153
      %s156 = sphi 0, %s155
      %s170 = sphi 0, %s156
      %s174 = sphi 0, %s174
      %s176 = sphi 0, %s174
      %s177 = sphi 0, %s176
      %s191 = sphi 0, %s177
      %s195 = sphi 0, %s195
      %s197 = sphi 0, %s195
      %s198 = sphi 0, %s197
      %s212 = sphi 0, %s198
      %s216 = sphi 0, %s216
      %s218 = sphi 0, %s216
      %s219 = sphi 0, %s218
      %s233 = sphi 0, %s219
      %s237 = sphi 0, %s237
      %s239 = sphi 0, %s237
      %s240 = sphi 0, %s239
      %s254 = sphi 0, %s240
      %s258 = sphi 0, %s258
      %s260 = sphi 0, %s258
      %s261 = sphi 0, %s260
      %s275 = sphi 0, %s261
      %s279 = sphi 0, %s279
      %s281 = sphi 0, %s279
      %s282 = sphi 0, %s281
      %s296 = sphi 0, %s282
      %s300 = sphi 0, %s300
      %s302 = sphi 0, %s300
      %s303 = sphi 0, %s302
      %s317 = sphi 0, %s303
      %s321 = sphi 0, %s321
      %s323 = sphi 0, %s321
      %s324 = sphi 0, %s323
      %s338 = sphi 0, %s324
      %s342 = sphi 0, %s342
      %s344 = sphi 0, %s342
      %s345 = sphi 0, %s344
      %s359 = sphi 0, %s345
      %s367 = sphi 0, %s369
      %s370 = sphi 0, %s367
      %s371 = sphi 0, %s370
      %s387 = sphi 0, %s371
      %s395 = sphi 0, %s397
      %s398 = sphi 0, %s395
      %s399 = sphi 0, %s398
      %s415 = sphi 0, %s399
    $region4: #{tpu_custom_call.1} parent=1 // loop_header_branch
      %35 = sbr.rel (%p33) target = $region8
    $region5: #{tpu_custom_call.1} parent=1 // loop_body
      %s37 = ssub.s32 %s32, 1
      %s38 = ssub.s32 %s32, 2
      %s45 = sadd.s32 1, %s40
      %p46 = scmp.ge.s32.totalorder %s45, 1
      %s47 = scalar_select %p46, 0, %s45
      %s48 = sadd.s32 1, %s39
      %s49 = scalar_select %p46, %s48, %s39
      %p50 = scmp.ge.s32.totalorder %s49, 2
      %s51 = scalar_select %p50, 0, %s49
      %s52 = ssub.s32 %s39, %s51
      %s53 = ssub.s32 %s40, %s47
      %s54 = sor.u32 %s52, %s53
      %p55 = scmp.eq.s32.totalorder %s54, 0
      %s57 = sadd.s32 %s56, 1
      %s58 = scalar_select %p55, %s56, %s57
      %p61 = pneg %p55
      %p62 = scmp.eq.s32.totalorder %s32, 1
      %p63 = por %p61, %p62
      %p64 = scmp.ne.s32.totalorder %s56, %s59
      %p65 = scmp.eq.s32.totalorder %s32, 0
      %p66 = por %p64, %p65
      %p67 = scmp.ne.s32.totalorder %s56, %s59
      %p68 = scmp.eq.s32.totalorder %s37, 1
      %p69 = por %p67, %p68
      %p70 = scmp.ne.s32.totalorder %s59, %s60
      %p71 = scmp.eq.s32.totalorder %s37, 0
      %p72 = por %p70, %p71
      %p73 = scmp.ne.s32.totalorder %s59, %s60
      %p74 = scmp.eq.s32.totalorder %s38, 1
      %p75 = por %p73, %p74
      %p77 = scmp.ne.s32.totalorder %s60, %s76
      %p78 = scmp.eq.s32.totalorder %s38, 0
      %p79 = por %p77, %p78
      %s80 = ssub.s32 %s39, %s51
      %p81 = scmp.eq.s32.totalorder %s80, 0
      %s83 = sadd.s32 %s82, 1
      %s84 = scalar_select %p81, %s82, %s83
      %p87 = pneg %p81
      %p88 = scmp.eq.s32.totalorder %s32, 1
      %p89 = por %p87, %p88
      %p90 = scmp.ne.s32.totalorder %s82, %s85
      %p91 = scmp.eq.s32.totalorder %s32, 0
      %p92 = por %p90, %p91
      %p93 = scmp.ne.s32.totalorder %s82, %s85
      %p94 = scmp.eq.s32.totalorder %s37, 1
      %p95 = por %p93, %p94
      %p96 = scmp.ne.s32.totalorder %s85, %s86
      %p97 = scmp.eq.s32.totalorder %s37, 0
      %p98 = por %p96, %p97
      %p99 = scmp.ne.s32.totalorder %s85, %s86
      %p100 = scmp.eq.s32.totalorder %s38, 1
      %p101 = por %p99, %p100
      %p103 = scmp.ne.s32.totalorder %s86, %s102
      %p104 = scmp.eq.s32.totalorder %s38, 0
      %p105 = por %p103, %p104
      %s106 = ssub.s32 %s39, %s51
      %p107 = scmp.eq.s32.totalorder %s106, 0
      %s109 = sadd.s32 %s108, 1
      %s110 = scalar_select %p107, %s108, %s109
      %p113 = pneg %p107
      %p114 = scmp.eq.s32.totalorder %s32, 1
      %p115 = por %p113, %p114
      %p116 = scmp.ne.s32.totalorder %s108, %s111
      %p117 = scmp.eq.s32.totalorder %s32, 0
      %p118 = por %p116, %p117
      %p119 = scmp.ne.s32.totalorder %s108, %s111
      %p120 = scmp.eq.s32.totalorder %s37, 1
      %p121 = por %p119, %p120
      %p122 = scmp.ne.s32.totalorder %s111, %s112
      %p123 = scmp.eq.s32.totalorder %s37, 0
      %p124 = por %p122, %p123
      %p125 = scmp.ne.s32.totalorder %s111, %s112
      %p126 = scmp.eq.s32.totalorder %s38, 1
      %p127 = por %p125, %p126
      %p129 = scmp.ne.s32.totalorder %s112, %s128
      %p130 = scmp.eq.s32.totalorder %s38, 0
      %p131 = por %p129, %p130
      %s133 = sadd.s32 %s132, 1
      %p136 = scmp.eq.s32.totalorder %s32, 1
      %p137 = scmp.ne.s32.totalorder %s132, %s134
      %p138 = scmp.eq.s32.totalorder %s32, 0
      %p139 = por %p137, %p138
      %p140 = scmp.ne.s32.totalorder %s132, %s134
      %p141 = scmp.eq.s32.totalorder %s37, 1
      %p142 = por %p140, %p141
      %p143 = scmp.ne.s32.totalorder %s134, %s135
      %p144 = scmp.eq.s32.totalorder %s37, 0
      %p145 = por %p143, %p144
      %p146 = scmp.ne.s32.totalorder %s134, %s135
      %p147 = scmp.eq.s32.totalorder %s38, 1
      %p148 = por %p146, %p147
      %p150 = scmp.ne.s32.totalorder %s135, %s149
      %p151 = scmp.eq.s32.totalorder %s38, 0
      %p152 = por %p150, %p151
      %s154 = sadd.s32 %s153, 1
      %p157 = scmp.eq.s32.totalorder %s32, 1
      %p158 = scmp.ne.s32.totalorder %s153, %s155
      %p159 = scmp.eq.s32.totalorder %s32, 0
      %p160 = por %p158, %p159
      %p161 = scmp.ne.s32.totalorder %s153, %s155
      %p162 = scmp.eq.s32.totalorder %s37, 1
      %p163 = por %p161, %p162
      %p164 = scmp.ne.s32.totalorder %s155, %s156
      %p165 = scmp.eq.s32.totalorder %s37, 0
      %p166 = por %p164, %p165
      %p167 = scmp.ne.s32.totalorder %s155, %s156
      %p168 = scmp.eq.s32.totalorder %s38, 1
      %p169 = por %p167, %p168
      %p171 = scmp.ne.s32.totalorder %s156, %s170
      %p172 = scmp.eq.s32.totalorder %s38, 0
      %p173 = por %p171, %p172
      %s175 = sadd.s32 %s174, 1
      %p178 = scmp.eq.s32.totalorder %s32, 1
      %p179 = scmp.ne.s32.totalorder %s174, %s176
      %p180 = scmp.eq.s32.totalorder %s32, 0
      %p181 = por %p179, %p180
      %p182 = scmp.ne.s32.totalorder %s174, %s176
      %p183 = scmp.eq.s32.totalorder %s37, 1
      %p184 = por %p182, %p183
      %p185 = scmp.ne.s32.totalorder %s176, %s177
      %p186 = scmp.eq.s32.totalorder %s37, 0
      %p187 = por %p185, %p186
      %p188 = scmp.ne.s32.totalorder %s176, %s177
      %p189 = scmp.eq.s32.totalorder %s38, 1
      %p190 = por %p188, %p189
      %p192 = scmp.ne.s32.totalorder %s177, %s191
      %p193 = scmp.eq.s32.totalorder %s38, 0
      %p194 = por %p192, %p193
      %s196 = sadd.s32 %s195, 1
      %p199 = scmp.eq.s32.totalorder %s32, 1
      %p200 = scmp.ne.s32.totalorder %s195, %s197
      %p201 = scmp.eq.s32.totalorder %s32, 0
      %p202 = por %p200, %p201
      %p203 = scmp.ne.s32.totalorder %s195, %s197
      %p204 = scmp.eq.s32.totalorder %s37, 1
      %p205 = por %p203, %p204
      %p206 = scmp.ne.s32.totalorder %s197, %s198
      %p207 = scmp.eq.s32.totalorder %s37, 0
      %p208 = por %p206, %p207
      %p209 = scmp.ne.s32.totalorder %s197, %s198
      %p210 = scmp.eq.s32.totalorder %s38, 1
      %p211 = por %p209, %p210
      %p213 = scmp.ne.s32.totalorder %s198, %s212
      %p214 = scmp.eq.s32.totalorder %s38, 0
      %p215 = por %p213, %p214
      %s217 = sadd.s32 %s216, 1
      %p220 = scmp.eq.s32.totalorder %s32, 1
      %p221 = scmp.ne.s32.totalorder %s216, %s218
      %p222 = scmp.eq.s32.totalorder %s32, 0
      %p223 = por %p221, %p222
      %p224 = scmp.ne.s32.totalorder %s216, %s218
      %p225 = scmp.eq.s32.totalorder %s37, 1
      %p226 = por %p224, %p225
      %p227 = scmp.ne.s32.totalorder %s218, %s219
      %p228 = scmp.eq.s32.totalorder %s37, 0
      %p229 = por %p227, %p228
      %p230 = scmp.ne.s32.totalorder %s218, %s219
      %p231 = scmp.eq.s32.totalorder %s38, 1
      %p232 = por %p230, %p231
      %p234 = scmp.ne.s32.totalorder %s219, %s233
      %p235 = scmp.eq.s32.totalorder %s38, 0
      %p236 = por %p234, %p235
      %s238 = sadd.s32 %s237, 1
      %p241 = scmp.eq.s32.totalorder %s32, 1
      %p242 = scmp.ne.s32.totalorder %s237, %s239
      %p243 = scmp.eq.s32.totalorder %s32, 0
      %p244 = por %p242, %p243
      %p245 = scmp.ne.s32.totalorder %s237, %s239
      %p246 = scmp.eq.s32.totalorder %s37, 1
      %p247 = por %p245, %p246
      %p248 = scmp.ne.s32.totalorder %s239, %s240
      %p249 = scmp.eq.s32.totalorder %s37, 0
      %p250 = por %p248, %p249
      %p251 = scmp.ne.s32.totalorder %s239, %s240
      %p252 = scmp.eq.s32.totalorder %s38, 1
      %p253 = por %p251, %p252
      %p255 = scmp.ne.s32.totalorder %s240, %s254
      %p256 = scmp.eq.s32.totalorder %s38, 0
      %p257 = por %p255, %p256
      %s259 = sadd.s32 %s258, 1
      %p262 = scmp.eq.s32.totalorder %s32, 1
      %p263 = scmp.ne.s32.totalorder %s258, %s260
      %p264 = scmp.eq.s32.totalorder %s32, 0
      %p265 = por %p263, %p264
      %p266 = scmp.ne.s32.totalorder %s258, %s260
      %p267 = scmp.eq.s32.totalorder %s37, 1
      %p268 = por %p266, %p267
      %p269 = scmp.ne.s32.totalorder %s260, %s261
      %p270 = scmp.eq.s32.totalorder %s37, 0
      %p271 = por %p269, %p270
      %p272 = scmp.ne.s32.totalorder %s260, %s261
      %p273 = scmp.eq.s32.totalorder %s38, 1
      %p274 = por %p272, %p273
      %p276 = scmp.ne.s32.totalorder %s261, %s275
      %p277 = scmp.eq.s32.totalorder %s38, 0
      %p278 = por %p276, %p277
      %s280 = sadd.s32 %s279, 1
      %p283 = scmp.eq.s32.totalorder %s32, 1
      %p284 = scmp.ne.s32.totalorder %s279, %s281
      %p285 = scmp.eq.s32.totalorder %s32, 0
      %p286 = por %p284, %p285
      %p287 = scmp.ne.s32.totalorder %s279, %s281
      %p288 = scmp.eq.s32.totalorder %s37, 1
      %p289 = por %p287, %p288
      %p290 = scmp.ne.s32.totalorder %s281, %s282
      %p291 = scmp.eq.s32.totalorder %s37, 0
      %p292 = por %p290, %p291
      %p293 = scmp.ne.s32.totalorder %s281, %s282
      %p294 = scmp.eq.s32.totalorder %s38, 1
      %p295 = por %p293, %p294
      %p297 = scmp.ne.s32.totalorder %s282, %s296
      %p298 = scmp.eq.s32.totalorder %s38, 0
      %p299 = por %p297, %p298
      %s301 = sadd.s32 %s300, 1
      %p304 = scmp.eq.s32.totalorder %s32, 1
      %p305 = scmp.ne.s32.totalorder %s300, %s302
      %p306 = scmp.eq.s32.totalorder %s32, 0
      %p307 = por %p305, %p306
      %p308 = scmp.ne.s32.totalorder %s300, %s302
      %p309 = scmp.eq.s32.totalorder %s37, 1
      %p310 = por %p308, %p309
      %p311 = scmp.ne.s32.totalorder %s302, %s303
      %p312 = scmp.eq.s32.totalorder %s37, 0
      %p313 = por %p311, %p312
      %p314 = scmp.ne.s32.totalorder %s302, %s303
      %p315 = scmp.eq.s32.totalorder %s38, 1
      %p316 = por %p314, %p315
      %p318 = scmp.ne.s32.totalorder %s303, %s317
      %p319 = scmp.eq.s32.totalorder %s38, 0
      %p320 = por %p318, %p319
      %s322 = sadd.s32 %s321, 1
      %p325 = scmp.eq.s32.totalorder %s32, 1
      %p326 = scmp.ne.s32.totalorder %s321, %s323
      %p327 = scmp.eq.s32.totalorder %s32, 0
      %p328 = por %p326, %p327
      %p329 = scmp.ne.s32.totalorder %s321, %s323
      %p330 = scmp.eq.s32.totalorder %s37, 1
      %p331 = por %p329, %p330
      %p332 = scmp.ne.s32.totalorder %s323, %s324
      %p333 = scmp.eq.s32.totalorder %s37, 0
      %p334 = por %p332, %p333
      %p335 = scmp.ne.s32.totalorder %s323, %s324
      %p336 = scmp.eq.s32.totalorder %s38, 1
      %p337 = por %p335, %p336
      %p339 = scmp.ne.s32.totalorder %s324, %s338
      %p340 = scmp.eq.s32.totalorder %s38, 0
      %p341 = por %p339, %p340
      %s343 = sadd.s32 %s342, 1
      %p346 = scmp.eq.s32.totalorder %s32, 1
      %p347 = scmp.ne.s32.totalorder %s342, %s344
      %p348 = scmp.eq.s32.totalorder %s32, 0
      %p349 = por %p347, %p348
      %p350 = scmp.ne.s32.totalorder %s342, %s344
      %p351 = scmp.eq.s32.totalorder %s37, 1
      %p352 = por %p350, %p351
      %p353 = scmp.ne.s32.totalorder %s344, %s345
      %p354 = scmp.eq.s32.totalorder %s37, 0
      %p355 = por %p353, %p354
      %p356 = scmp.ne.s32.totalorder %s344, %s345
      %p357 = scmp.eq.s32.totalorder %s38, 1
      %p358 = por %p356, %p357
      %p360 = scmp.ne.s32.totalorder %s345, %s359
      %p361 = scmp.eq.s32.totalorder %s38, 0
      %p362 = por %p360, %p361
      %s363 = ssub.s32 %s39, %s51
      %s364 = ssub.s32 %s40, %s47
      %s365 = sor.u32 %s363, %s364
      %p366 = scmp.eq.s32.totalorder %s365, 0
      %s368 = sadd.s32 %s367, 1
      %s369 = scalar_select %p366, %s367, %s368
      %p372 = pneg %p366
      %p373 = scmp.eq.s32.totalorder %s32, 1
      %p374 = por %p372, %p373
      %p375 = scmp.ne.s32.totalorder %s367, %s370
      %p376 = scmp.eq.s32.totalorder %s32, 0
      %p377 = por %p375, %p376
      %p378 = scmp.ne.s32.totalorder %s367, %s370
      %p379 = scmp.eq.s32.totalorder %s37, 1
      %p380 = por %p378, %p379
      %p381 = scmp.ne.s32.totalorder %s370, %s371
      %p382 = scmp.eq.s32.totalorder %s37, 0
      %p383 = por %p381, %p382
      %p384 = scmp.ne.s32.totalorder %s370, %s371
      %p385 = scmp.eq.s32.totalorder %s38, 1
      %p386 = por %p384, %p385
      %p388 = scmp.ne.s32.totalorder %s371, %s387
      %p389 = scmp.eq.s32.totalorder %s38, 0
      %p390 = por %p388, %p389
      %s391 = ssub.s32 %s39, %s51
      %s392 = ssub.s32 %s40, %s47
      %s393 = sor.u32 %s391, %s392
      %p394 = scmp.eq.s32.totalorder %s393, 0
      %s396 = sadd.s32 %s395, 1
      %s397 = scalar_select %p394, %s395, %s396
      %p400 = pneg %p394
      %p401 = scmp.eq.s32.totalorder %s32, 1
      %p402 = por %p400, %p401
      %p403 = scmp.ne.s32.totalorder %s395, %s398
      %p404 = scmp.eq.s32.totalorder %s32, 0
      %p405 = por %p403, %p404
      %p406 = scmp.ne.s32.totalorder %s395, %s398
      %p407 = scmp.eq.s32.totalorder %s37, 1
      %p408 = por %p406, %p407
      %p409 = scmp.ne.s32.totalorder %s398, %s399
      %p410 = scmp.eq.s32.totalorder %s37, 0
      %p411 = por %p409, %p410
      %p412 = scmp.ne.s32.totalorder %s398, %s399
      %p413 = scmp.eq.s32.totalorder %s38, 1
      %p414 = por %p412, %p413
      %p416 = scmp.ne.s32.totalorder %s399, %s415
      %p417 = scmp.eq.s32.totalorder %s38, 0
      %p418 = por %p416, %p417
      %p419 = scmp.le.s32.totalorder 1, %s32
      %p420 = scmp.lt.s32.totalorder %s32, 3
      %p421 = pnand %p419, %p420
      %p422 = pneg %p421
      // Predicated region
      $region9: #{tpu_custom_call.1} parent=5 // pred_check
        _
      $region10: #{tpu_custom_call.1} parent=5 // pred_check_branch
        %424 = sbr.rel (%p421) target = $region12
      $region11: #{tpu_custom_call.1} parent=5 // pred_region
        %s425 = ssub.s32 %s32, 1
        // Predicated region
        $region13: #{tpu_custom_call.1} parent=11 // pred_check
          %p426 = pneg %p145
        $region14: #{tpu_custom_call.1} parent=11 // pred_check_branch
          %428 = sbr.rel (%p426) target = $region16
        $region15: #{tpu_custom_call.1} parent=11 // pred_region
          _
        $region16: #{tpu_custom_call.1} parent=11 // pred_fallthru
          _
        // Predicated region
        $region17: #{tpu_custom_call.1} parent=11 // pred_check
          %p429 = pneg %p166
        $region18: #{tpu_custom_call.1} parent=11 // pred_check_branch
          %431 = sbr.rel (%p429) target = $region20
        $region19: #{tpu_custom_call.1} parent=11 // pred_region
          %s433 = ssub.s32 256, 256
          %434 = vsyncadd [#allocation3], %s433
          %s435 = sshll.u32 [#allocation2], 4
          %s436 = int_to_ptr.vmem [resolvable:$true] %s435
          %441 = dma.hbm_to_vmem [thread:$0]  %s4, 256, %s436, [#allocation3], 64, 64, 4
        $region20: #{tpu_custom_call.1} parent=11 // pred_fallthru
          _
        // Predicated region
        $region21: #{tpu_custom_call.1} parent=11 // pred_check
          %p442 = pneg %p187
        $region22: #{tpu_custom_call.1} parent=11 // pred_check_branch
          %444 = sbr.rel (%p442) target = $region24
        $region23: #{tpu_custom_call.1} parent=11 // pred_region
          %s446 = ssub.s32 256, 256
          %447 = vsyncadd [#allocation6], %s446
          %s448 = sshll.u32 [#allocation5], 4
          %s449 = int_to_ptr.vmem [resolvable:$true] %s448
          %454 = dma.hbm_to_vmem [thread:$0]  %s5, 256, %s449, [#allocation6], 64, 64, 4
        $region24: #{tpu_custom_call.1} parent=11 // pred_fallthru
          _
        // Predicated region
        $region25: #{tpu_custom_call.1} parent=11 // pred_check
          %p455 = pneg %p208
        $region26: #{tpu_custom_call.1} parent=11 // pred_check_branch
          %457 = sbr.rel (%p455) target = $region28
        $region27: #{tpu_custom_call.1} parent=11 // pred_region
          %s459 = ssub.s32 16, 16
          %460 = vsyncadd [#allocation6], %s459
          %s462 = sshll.u32 [#allocation7], 4
          %s463 = int_to_ptr.vmem [resolvable:$true] %s462
          %465 = dma.hbm_to_vmem [thread:$0]  %s6, 16, %s463, [#allocation6]
        $region28: #{tpu_custom_call.1} parent=11 // pred_fallthru
          _
        // Predicated region
        $region29: #{tpu_custom_call.1} parent=11 // pred_check
          %p466 = pneg %p229
        $region30: #{tpu_custom_call.1} parent=11 // pred_check_branch
          %468 = sbr.rel (%p466) target = $region32
        $region31: #{tpu_custom_call.1} parent=11 // pred_region
          %s470 = ssub.s32 16, 16
          %471 = vsyncadd [#allocation9], %s470
          %s473 = sshll.u32 [#allocation8], 4
          %s474 = int_to_ptr.vmem [resolvable:$true] %s473
          %476 = dma.hbm_to_vmem [thread:$0]  %s7, 16, %s474, [#allocation9]
        $region32: #{tpu_custom_call.1} parent=11 // pred_fallthru
          _
        // Predicated region
        $region33: #{tpu_custom_call.1} parent=11 // pred_check
          %p477 = pneg %p250
        $region34: #{tpu_custom_call.1} parent=11 // pred_check_branch
          %479 = sbr.rel (%p477) target = $region36
        $region35: #{tpu_custom_call.1} parent=11 // pred_region
          %s481 = ssub.s32 16, 16
          %482 = vsyncadd [#allocation9], %s481
          %s484 = sshll.u32 [#allocation10], 4
          %s485 = int_to_ptr.vmem [resolvable:$true] %s484
          %487 = dma.hbm_to_vmem [thread:$0]  %s8, 16, %s485, [#allocation9]
        $region36: #{tpu_custom_call.1} parent=11 // pred_fallthru
          _
        // Predicated region
        $region37: #{tpu_custom_call.1} parent=11 // pred_check
          %p488 = pneg %p271
        $region38: #{tpu_custom_call.1} parent=11 // pred_check_branch
          %490 = sbr.rel (%p488) target = $region40
        $region39: #{tpu_custom_call.1} parent=11 // pred_region
          %s492 = ssub.s32 16, 16
          %493 = vsyncadd [#allocation12], %s492
          %s495 = sshll.u32 [#allocation11], 4
          %s496 = int_to_ptr.vmem [resolvable:$true] %s495
          %498 = dma.hbm_to_vmem [thread:$0]  %s9, 16, %s496, [#allocation12]
        $region40: #{tpu_custom_call.1} parent=11 // pred_fallthru
          _
        // Predicated region
        $region41: #{tpu_custom_call.1} parent=11 // pred_check
          %p499 = pneg %p292
        $region42: #{tpu_custom_call.1} parent=11 // pred_check_branch
          %501 = sbr.rel (%p499) target = $region44
        $region43: #{tpu_custom_call.1} parent=11 // pred_region
          _
        $region44: #{tpu_custom_call.1} parent=11 // pred_fallthru
          _
        // Predicated region
        $region45: #{tpu_custom_call.1} parent=11 // pred_check
          %p502 = pneg %p313
        $region46: #{tpu_custom_call.1} parent=11 // pred_check_branch
          %504 = sbr.rel (%p502) target = $region48
        $region47: #{tpu_custom_call.1} parent=11 // pred_region
          _
        $region48: #{tpu_custom_call.1} parent=11 // pred_fallthru
          _
        // Predicated region
        $region49: #{tpu_custom_call.1} parent=11 // pred_check
          %p505 = pneg %p334
        $region50: #{tpu_custom_call.1} parent=11 // pred_check_branch
          %507 = sbr.rel (%p505) target = $region52
        $region51: #{tpu_custom_call.1} parent=11 // pred_region
          _
        $region52: #{tpu_custom_call.1} parent=11 // pred_fallthru
          _
        // Predicated region
        $region53: #{tpu_custom_call.1} parent=11 // pred_check
          %p508 = pneg %p355
        $region54: #{tpu_custom_call.1} parent=11 // pred_check_branch
          %510 = sbr.rel (%p508) target = $region56
        $region55: #{tpu_custom_call.1} parent=11 // pred_region
          _
        $region56: #{tpu_custom_call.1} parent=11 // pred_fallthru
          _
      $region12: #{tpu_custom_call.1} parent=5 // pred_fallthru
        _
      %p511 = scmp.lt.s32.totalorder %s32, 2
      // Predicated region
      $region57: #{tpu_custom_call.1} parent=5 // pred_check
        %p512 = pneg %p511
      $region58: #{tpu_custom_call.1} parent=5 // pred_check_branch
        %514 = sbr.rel (%p512) target = $region60
      $region59: #{tpu_custom_call.1} parent=5 // pred_region
        // Predicated region
        $region61: #{tpu_custom_call.1} parent=59 // pred_check
          %p515 = pneg %p66
        $region62: #{tpu_custom_call.1} parent=59 // pred_check_branch
          %517 = sbr.rel (%p515) target = $region64
        $region63: #{tpu_custom_call.1} parent=59 // pred_region
          %p518 = scmp.lt.s32.totalorder %s39, 1
          %s519 = scalar_select %p518, %s39, 1
          %p520 = scmp.lt.s32.totalorder %s40, 0
          %s521 = scalar_select %p520, %s40, 0
          %s522 = sadd.s32 %s521, %s519
          %s523 = smul.addr %s522, 8
          %s524 = scalar_lea.vmem %s0, %s523
        $region64: #{tpu_custom_call.1} parent=59 // pred_fallthru
          _
        // Predicated region
        $region65: #{tpu_custom_call.1} parent=59 // pred_check
          %p525 = pneg %p92
        $region66: #{tpu_custom_call.1} parent=59 // pred_check_branch
          %527 = sbr.rel (%p525) target = $region68
        $region67: #{tpu_custom_call.1} parent=59 // pred_region
          %p528 = scmp.lt.s32.totalorder %s39, 1
          %s529 = scalar_select %p528, %s39, 1
          %s530 = smul.addr %s529, 8
          %s531 = scalar_lea.vmem %s1, %s530
        $region68: #{tpu_custom_call.1} parent=59 // pred_fallthru
          _
        // Predicated region
        $region69: #{tpu_custom_call.1} parent=59 // pred_check
          %p532 = pneg %p118
        $region70: #{tpu_custom_call.1} parent=59 // pred_check_branch
          %534 = sbr.rel (%p532) target = $region72
        $region71: #{tpu_custom_call.1} parent=59 // pred_region
          %p535 = scmp.lt.s32.totalorder %s39, 1
          %s536 = scalar_select %p535, %s39, 1
          %s537 = scalar_lea.vmem %s2, %s536
        $region72: #{tpu_custom_call.1} parent=59 // pred_fallthru
          _
      $region60: #{tpu_custom_call.1} parent=5 // pred_fallthru
        _
      %p538 = scmp.le.s32.totalorder 1, %s32
      %p539 = scmp.lt.s32.totalorder %s32, 3
      %p540 = pnand %p538, %p539
      %p541 = pneg %p540
      // Predicated region
      $region73: #{tpu_custom_call.1} parent=5 // pred_check
        _
      $region74: #{tpu_custom_call.1} parent=5 // pred_check_branch
        %543 = sbr.rel (%p540) target = $region76
      $region75: #{tpu_custom_call.1} parent=5 // pred_region
        %s544 = ssub.s32 %s32, 1
        // Predicated region
        $region77: #{tpu_custom_call.1} parent=75 // pred_check
          %p545 = pneg %p166
        $region78: #{tpu_custom_call.1} parent=75 // pred_check_branch
          %547 = sbr.rel (%p545) target = $region80
        $region79: #{tpu_custom_call.1} parent=75 // pred_region
          %548 = dma.done [#allocation3], 256
        $region80: #{tpu_custom_call.1} parent=75 // pred_fallthru
          _
        // Predicated region
        $region81: #{tpu_custom_call.1} parent=75 // pred_check
          %p549 = pneg %p187
        $region82: #{tpu_custom_call.1} parent=75 // pred_check_branch
          %551 = sbr.rel (%p549) target = $region84
        $region83: #{tpu_custom_call.1} parent=75 // pred_region
          %552 = dma.done [#allocation6], 256
        $region84: #{tpu_custom_call.1} parent=75 // pred_fallthru
          _
        // Predicated region
        $region85: #{tpu_custom_call.1} parent=75 // pred_check
          %p553 = pneg %p208
        $region86: #{tpu_custom_call.1} parent=75 // pred_check_branch
          %555 = sbr.rel (%p553) target = $region88
        $region87: #{tpu_custom_call.1} parent=75 // pred_region
          %556 = dma.done [#allocation6], 16
        $region88: #{tpu_custom_call.1} parent=75 // pred_fallthru
          _
        // Predicated region
        $region89: #{tpu_custom_call.1} parent=75 // pred_check
          %p557 = pneg %p229
        $region90: #{tpu_custom_call.1} parent=75 // pred_check_branch
          %559 = sbr.rel (%p557) target = $region92
        $region91: #{tpu_custom_call.1} parent=75 // pred_region
          %560 = dma.done [#allocation9], 16
        $region92: #{tpu_custom_call.1} parent=75 // pred_fallthru
          _
        // Predicated region
        $region93: #{tpu_custom_call.1} parent=75 // pred_check
          %p561 = pneg %p250
        $region94: #{tpu_custom_call.1} parent=75 // pred_check_branch
          %563 = sbr.rel (%p561) target = $region96
        $region95: #{tpu_custom_call.1} parent=75 // pred_region
          %564 = dma.done [#allocation9], 16
        $region96: #{tpu_custom_call.1} parent=75 // pred_fallthru
          _
        // Predicated region
        $region97: #{tpu_custom_call.1} parent=75 // pred_check
          %p565 = pneg %p271
        $region98: #{tpu_custom_call.1} parent=75 // pred_check_branch
          %567 = sbr.rel (%p565) target = $region100
        $region99: #{tpu_custom_call.1} parent=75 // pred_region
          %568 = dma.done [#allocation12], 16
        $region100: #{tpu_custom_call.1} parent=75 // pred_fallthru
          _
        %p569 = scmp.lt.s32.totalorder %s41, 1
        %s570 = scalar_select %p569, %s41, 1
        %p571 = scmp.lt.s32.totalorder %s42, 0
        %s572 = scalar_select %p571, %s42, 0
        %s573 = sadd.s32 %s572, %s570
        %s574 = smul.addr %s573, 8
        %s575 = scalar_lea.vmem %s0, %s574
        %p576 = pneg %p72
        %p577 = pneg %p69
        %p578 = scmp.lt.s32.totalorder %s41, 1
        %s579 = scalar_select %p578, %s41, 1
        %s580 = smul.addr %s579, 8
        %s581 = scalar_lea.vmem %s1, %s580
        %p582 = pneg %p98
        %p583 = pneg %p95
        %p584 = scmp.lt.s32.totalorder %s41, 1
        %s585 = scalar_select %p584, %s41, 1
        %s586 = scalar_lea.vmem %s2, %s585
        %p587 = pneg %p124
        %p588 = pneg %p121
        %p589 = pneg %p145
        %p590 = pneg %p142
        %p591 = pneg %p166
        %p592 = pneg %p163
        %p593 = pneg %p187
        %p594 = pneg %p184
        %p595 = pneg %p208
        %p596 = pneg %p205
        %p597 = pneg %p229
        %p598 = pneg %p226
        %p599 = pneg %p250
        %p600 = pneg %p247
        %p601 = pneg %p271
        %p602 = pneg %p268
        %p603 = pneg %p292
        %p604 = pneg %p289
        %p605 = pneg %p313
        %p606 = pneg %p310
        %p607 = pneg %p334
        %p608 = pneg %p331
        %p609 = pneg %p355
        %p610 = pneg %p352
        %p611 = pneg %p383
        %p612 = pneg %p380
        %s613 = sand.u32 %s370, 1
        %s614 = scalar_lea.sflag [#allocation4], %s613
        %s615 = sand.u32 %s370, 1
        %s616 = smul.addr %s615, 8
        %s617 = scalar_lea.vmem [#allocation13], %s616
        %p618 = pneg %p411
        %p619 = pneg %p408
        %s620 = sand.u32 %s398, 1
        %s621 = scalar_lea.sflag [#allocation15], %s620
        %s622 = sand.u32 %s398, 1
        %s623 = smul.addr %s622, 16
        %s624 = scalar_lea.vmem [#allocation14], %s623
        %p625 = scmp.lt.s32.totalorder %s41, 1
        %s626 = scalar_select %p625, %s41, 1
        %p627 = scmp.lt.s32.totalorder %s42, 0
        %s628 = scalar_select %p627, %s42, 0
        %s629 = sadd.s32 %s628, %s626
        %s630 = smul.addr %s629, 8
        %s631 = scalar_lea.vmem %s0, %s630
        %p632 = scmp.lt.s32.totalorder %s41, 1
        %s633 = scalar_select %p632, %s41, 1
        %s634 = smul.addr %s633, 8
        %s635 = scalar_lea.vmem %s1, %s634
        %p636 = scmp.lt.s32.totalorder %s41, 1
        %s637 = scalar_select %p636, %s41, 1
        %s638 = scalar_lea.vmem %s2, %s637
        %v640 = vld [vmem:[%s631] sm:$0xff]
        %v641 = vld [vmem:[%s635] sm:$0xff]
        %v642 = vpack.c.bf16 %v640, %v640
        %v643 = vld [vmem:[%s3] sm:$0xf]
        %v644 = vld [vmem:[%s3 + $0x4] sm:$0xf]
        %v645 = vld [vmem:[%s3 + $0x8] sm:$0xf]
        %v646 = vld [vmem:[%s3 + $0xc] sm:$0xf]
        %v651 = vunpack.c.l.b16 %v643
        %v652 = vunpack.c.l.b16 %v644
        %v653 = vunpack.c.l.b16 %v645
        %v654 = vunpack.c.l.b16 %v646
        %v655 = vpack.c.b16 %v652, %v651
        %v656 = vpack.c.b16 %v654, %v653
        %vm659 = vcmask 261120
        %v661 = vsel %vm659, %v642, 0
        %663 = vmatprep.subr.bf16.mxu0 0
        %664 = vmatpush1.bf16.msra.mxu0 %v655
        %665 = vmatprep.subr.bf16.mxu0 0
        %666 = vmatpush1.bf16.msra.mxu0 %v656
        %667 = vmatprep.subr.bf16.mxu0 0
        %668 = vmatpush1.bf16.msra.mxu0 0
        %669 = vmatprep.subr.bf16.mxu0 0
        %670 = vmatpush1.bf16.msra.mxu0 0
        %671 = vmatprep.subr.bf16.mxu0 0
        %672 = vmatpush1.bf16.msra.mxu0 0
        %673 = vmatprep.subr.bf16.mxu0 0
        %674 = vmatpush1.bf16.msra.mxu0 0
        %675 = vmatprep.subr.bf16.mxu0 0
        %676 = vmatpush1.bf16.msra.mxu0 0
        %677 = vmatprep.subr.bf16.mxu0 0
        %678 = vmatpush1.bf16.msra.mxu0 0
        %679 = vmatprep.subr.bf16.mxu0 0
        %680 = vmatpush1.bf16.msra.mxu0 0
        %681 = vmatprep.subr.bf16.mxu0 0
        %682 = vmatpush1.bf16.msra.mxu0 0
        %683 = vmatprep.subr.bf16.mxu0 0
        %684 = vmatpush1.bf16.msra.mxu0 0
        %685 = vmatprep.subr.bf16.mxu0 0
        %686 = vmatpush1.bf16.msra.mxu0 0
        %687 = vmatprep.subr.bf16.mxu0 0
        %688 = vmatpush1.bf16.msra.mxu0 0
        %689 = vmatprep.subr.bf16.mxu0 0
        %690 = vmatpush1.bf16.msra.mxu0 0
        %691 = vmatprep.subr.bf16.mxu0 0
        %692 = vmatpush1.bf16.msra.mxu0 0
        %693 = vmatprep.subr.bf16.mxu0 0
        %694 = vmatpush1.bf16.msra.mxu0 0
        %695 = vmatprep.mubr.bf16.mxu0 0
        %696 = vmatmul.mubr.bf16.gmra.mrb[0].mxu0 %v661
        %v697 = vpop.f32.mrb[0].mxu0
        %v698 = vadd.f32 0.0, %v697
        %v699 = vpop.f32.mrb[0].mxu0
        %v700 = vpop.f32.mrb[0].mxu0
        %v701 = vpop.f32.mrb[0].mxu0
        %702 = vdwg.mxu0
        %v703 = vpack.c.bf16 %v641, %v641
        %v704 = vld [vmem:[#allocation2] sm:$0xf]
        %v705 = vld [vmem:[#allocation2 + $0x4] sm:$0xf]
        %v706 = vld [vmem:[#allocation2 + $0x8] sm:$0xf]
        %v707 = vld [vmem:[#allocation2 + $0xc] sm:$0xf]
        %v712 = vunpack.c.l.b16 %v704
        %v713 = vunpack.c.l.b16 %v705
        %v714 = vunpack.c.l.b16 %v706
        %v715 = vunpack.c.l.b16 %v707
        %v716 = vpack.c.b16 %v713, %v712
        %v717 = vpack.c.b16 %v715, %v714
        %v721 = vsel %vm659, %v703, 0
        %723 = vmatprep.subr.bf16.mxu0 0
        %724 = vmatpush1.bf16.msra.mxu0 %v716
        %725 = vmatprep.subr.bf16.mxu0 0
        %726 = vmatpush1.bf16.msra.mxu0 %v717
        %727 = vmatprep.subr.bf16.mxu0 0
        %728 = vmatpush1.bf16.msra.mxu0 0
        %729 = vmatprep.subr.bf16.mxu0 0
        %730 = vmatpush1.bf16.msra.mxu0 0
        %731 = vmatprep.subr.bf16.mxu0 0
        %732 = vmatpush1.bf16.msra.mxu0 0
        %733 = vmatprep.subr.bf16.mxu0 0
        %734 = vmatpush1.bf16.msra.mxu0 0
        %735 = vmatprep.subr.bf16.mxu0 0
        %736 = vmatpush1.bf16.msra.mxu0 0
        %737 = vmatprep.subr.bf16.mxu0 0
        %738 = vmatpush1.bf16.msra.mxu0 0
        %739 = vmatprep.subr.bf16.mxu0 0
        %740 = vmatpush1.bf16.msra.mxu0 0
        %741 = vmatprep.subr.bf16.mxu0 0
        %742 = vmatpush1.bf16.msra.mxu0 0
        %743 = vmatprep.subr.bf16.mxu0 0
        %744 = vmatpush1.bf16.msra.mxu0 0
        %745 = vmatprep.subr.bf16.mxu0 0
        %746 = vmatpush1.bf16.msra.mxu0 0
        %747 = vmatprep.subr.bf16.mxu0 0
        %748 = vmatpush1.bf16.msra.mxu0 0
        %749 = vmatprep.subr.bf16.mxu0 0
        %750 = vmatpush1.bf16.msra.mxu0 0
        %751 = vmatprep.subr.bf16.mxu0 0
        %752 = vmatpush1.bf16.msra.mxu0 0
        %753 = vmatprep.subr.bf16.mxu0 0
        %754 = vmatpush1.bf16.msra.mxu0 0
        %755 = vmatprep.mubr.bf16.mxu0 0
        %756 = vmatmul.mubr.bf16.gmra.mrb[0].mxu0 %v721
        %v757 = vpop.f32.mrb[0].mxu0
        %v758 = vadd.f32 0.0, %v757
        %v759 = vpop.f32.mrb[0].mxu0
        %v760 = vpop.f32.mrb[0].mxu0
        %v761 = vpop.f32.mrb[0].mxu0
        %762 = vdwg.mxu0
        %764 = vrot.lane.b32.xlu0 %v698, 120
        %v765 = vpop.permute.xlu0 %764
        %767 = vrot.lane.b32.xlu0 %v698, 112
        %v768 = vpop.permute.xlu0 %767
        %770 = vrot.lane.b32.xlu0 %v698, 104
        %v771 = vpop.permute.xlu0 %770
        %v773 = vpack.c.bf16 %v698, %v698
        %v774 = vpack.c.bf16 %v765, %v765
        %v775 = vpack.c.bf16 %v768, %v768
        %v776 = vpack.c.bf16 %v771, %v771
        %778 = vrot.lane.b32.xlu0 %v758, 120
        %v779 = vpop.permute.xlu0 %778
        %781 = vrot.lane.b32.xlu0 %v758, 112
        %v782 = vpop.permute.xlu0 %781
        %784 = vrot.lane.b32.xlu0 %v758, 104
        %v785 = vpop.permute.xlu0 %784
        %v787 = vpack.c.bf16 %v758, %v758
        %v788 = vpack.c.bf16 %v779, %v779
        %v789 = vpack.c.bf16 %v782, %v782
        %v790 = vpack.c.bf16 %v785, %v785
        %v791 = vld [vmem:[%s638] sm:$0x1]
        %v793 = vlaneseq
        %v794 = vshrl.u32 %v793, 7
        %v795 = vsub.s32 0, %v794
        %v796 = vrot.slane %v791, %v795
        %vm798 = vcmask 64512
        %v800 = vsel %vm798, %v773, 0
        %v803 = vsel %vm798, %v787, 0
        %805 = vmatprep.subr.bf16.mxu0 0
        %806 = vmatpush1.bf16.xpose.msra.mxu0 %v803
        %807 = vmatprep.subr.bf16.mxu0 0
        %808 = vmatpush1.bf16.xpose.msra.mxu0 0
        %809 = vmatprep.subr.bf16.mxu0 0
        %810 = vmatpush1.bf16.xpose.msra.mxu0 0
        %811 = vmatprep.subr.bf16.mxu0 0
        %812 = vmatpush1.bf16.xpose.msra.mxu0 0
        %813 = vmatprep.subr.bf16.mxu0 0
        %814 = vmatpush1.bf16.xpose.msra.mxu0 0
        %815 = vmatprep.subr.bf16.mxu0 0
        %816 = vmatpush1.bf16.xpose.msra.mxu0 0
        %817 = vmatprep.subr.bf16.mxu0 0
        %818 = vmatpush1.bf16.xpose.msra.mxu0 0
        %819 = vmatprep.subr.bf16.mxu0 0
        %820 = vmatpush1.bf16.xpose.msra.mxu0 0
        %821 = vmatprep.subr.bf16.mxu0 0
        %822 = vmatpush1.bf16.xpose.msra.mxu0 0
        %823 = vmatprep.subr.bf16.mxu0 0
        %824 = vmatpush1.bf16.xpose.msra.mxu0 0
        %825 = vmatprep.subr.bf16.mxu0 0
        %826 = vmatpush1.bf16.xpose.msra.mxu0 0
        %827 = vmatprep.subr.bf16.mxu0 0
        %828 = vmatpush1.bf16.xpose.msra.mxu0 0
        %829 = vmatprep.subr.bf16.mxu0 0
        %830 = vmatpush1.bf16.xpose.msra.mxu0 0
        %831 = vmatprep.subr.bf16.mxu0 0
        %832 = vmatpush1.bf16.xpose.msra.mxu0 0
        %833 = vmatprep.subr.bf16.mxu0 0
        %834 = vmatpush1.bf16.xpose.msra.mxu0 0
        %835 = vmatprep.subr.bf16.mxu0 0
        %836 = vmatpush1.bf16.xpose.msra.mxu0 0
        %837 = vmatprep.mubr.bf16.mxu0 0
        %838 = vmatmul.mubr.bf16.gmra.mrb[0].mxu0 %v800
        %v839 = vpop.f32.mrb[0].mxu0
        %v840 = vadd.f32 %v796, %v839
        %v841 = vpop.f32.mrb[0].mxu0
        %v842 = vpop.f32.mrb[0].mxu0
        %v843 = vpop.f32.mrb[0].mxu0
        %844 = vdwg.mxu0
        %v846 = vsel %vm798, %v774, 0
        %v849 = vsel %vm798, %v788, 0
        %851 = vmatprep.subr.bf16.mxu0 0
        %852 = vmatpush1.bf16.xpose.msra.mxu0 %v849
        %853 = vmatprep.subr.bf16.mxu0 0
        %854 = vmatpush1.bf16.xpose.msra.mxu0 0
        %855 = vmatprep.subr.bf16.mxu0 0
        %856 = vmatpush1.bf16.xpose.msra.mxu0 0
        %857 = vmatprep.subr.bf16.mxu0 0
        %858 = vmatpush1.bf16.xpose.msra.mxu0 0
        %859 = vmatprep.subr.bf16.mxu0 0
        %860 = vmatpush1.bf16.xpose.msra.mxu0 0
        %861 = vmatprep.subr.bf16.mxu0 0
        %862 = vmatpush1.bf16.xpose.msra.mxu0 0
        %863 = vmatprep.subr.bf16.mxu0 0
        %864 = vmatpush1.bf16.xpose.msra.mxu0 0
        %865 = vmatprep.subr.bf16.mxu0 0
        %866 = vmatpush1.bf16.xpose.msra.mxu0 0
        %867 = vmatprep.subr.bf16.mxu0 0
        %868 = vmatpush1.bf16.xpose.msra.mxu0 0
        %869 = vmatprep.subr.bf16.mxu0 0
        %870 = vmatpush1.bf16.xpose.msra.mxu0 0
        %871 = vmatprep.subr.bf16.mxu0 0
        %872 = vmatpush1.bf16.xpose.msra.mxu0 0
        %873 = vmatprep.subr.bf16.mxu0 0
        %874 = vmatpush1.bf16.xpose.msra.mxu0 0
        %875 = vmatprep.subr.bf16.mxu0 0
        %876 = vmatpush1.bf16.xpose.msra.mxu0 0
        %877 = vmatprep.subr.bf16.mxu0 0
        %878 = vmatpush1.bf16.xpose.msra.mxu0 0
        %879 = vmatprep.subr.bf16.mxu0 0
        %880 = vmatpush1.bf16.xpose.msra.mxu0 0
        %881 = vmatprep.subr.bf16.mxu0 0
        %882 = vmatpush1.bf16.xpose.msra.mxu0 0
        %883 = vmatprep.mubr.bf16.mxu0 0
        %884 = vmatmul.mubr.bf16.gmra.mrb[0].mxu0 %v846
        %v885 = vpop.f32.mrb[0].mxu0
        %v886 = vadd.f32 %v796, %v885
        %v887 = vpop.f32.mrb[0].mxu0
        %v888 = vpop.f32.mrb[0].mxu0
        %v889 = vpop.f32.mrb[0].mxu0
        %890 = vdwg.mxu0
        %v892 = vsel %vm798, %v775, 0
        %v895 = vsel %vm798, %v789, 0
        %897 = vmatprep.subr.bf16.mxu0 0
        %898 = vmatpush1.bf16.xpose.msra.mxu0 %v895
        %899 = vmatprep.subr.bf16.mxu0 0
        %900 = vmatpush1.bf16.xpose.msra.mxu0 0
        %901 = vmatprep.subr.bf16.mxu0 0
        %902 = vmatpush1.bf16.xpose.msra.mxu0 0
        %903 = vmatprep.subr.bf16.mxu0 0
        %904 = vmatpush1.bf16.xpose.msra.mxu0 0
        %905 = vmatprep.subr.bf16.mxu0 0
        %906 = vmatpush1.bf16.xpose.msra.mxu0 0
        %907 = vmatprep.subr.bf16.mxu0 0
        %908 = vmatpush1.bf16.xpose.msra.mxu0 0
        %909 = vmatprep.subr.bf16.mxu0 0
        %910 = vmatpush1.bf16.xpose.msra.mxu0 0
        %911 = vmatprep.subr.bf16.mxu0 0
        %912 = vmatpush1.bf16.xpose.msra.mxu0 0
        %913 = vmatprep.subr.bf16.mxu0 0
        %914 = vmatpush1.bf16.xpose.msra.mxu0 0
        %915 = vmatprep.subr.bf16.mxu0 0
        %916 = vmatpush1.bf16.xpose.msra.mxu0 0
        %917 = vmatprep.subr.bf16.mxu0 0
        %918 = vmatpush1.bf16.xpose.msra.mxu0 0
        %919 = vmatprep.subr.bf16.mxu0 0
        %920 = vmatpush1.bf16.xpose.msra.mxu0 0
        %921 = vmatprep.subr.bf16.mxu0 0
        %922 = vmatpush1.bf16.xpose.msra.mxu0 0
        %923 = vmatprep.subr.bf16.mxu0 0
        %924 = vmatpush1.bf16.xpose.msra.mxu0 0
        %925 = vmatprep.subr.bf16.mxu0 0
        %926 = vmatpush1.bf16.xpose.msra.mxu0 0
        %927 = vmatprep.subr.bf16.mxu0 0
        %928 = vmatpush1.bf16.xpose.msra.mxu0 0
        %929 = vmatprep.mubr.bf16.mxu0 0
        %930 = vmatmul.mubr.bf16.gmra.mrb[0].mxu0 %v892
        %v931 = vpop.f32.mrb[0].mxu0
        %v932 = vadd.f32 %v796, %v931
        %v933 = vpop.f32.mrb[0].mxu0
        %v934 = vpop.f32.mrb[0].mxu0
        %v935 = vpop.f32.mrb[0].mxu0
        %936 = vdwg.mxu0
        %v938 = vsel %vm798, %v776, 0
        %v941 = vsel %vm798, %v790, 0
        %943 = vmatprep.subr.bf16.mxu0 0
        %944 = vmatpush1.bf16.xpose.msra.mxu0 %v941
        %945 = vmatprep.subr.bf16.mxu0 0
        %946 = vmatpush1.bf16.xpose.msra.mxu0 0
        %947 = vmatprep.subr.bf16.mxu0 0
        %948 = vmatpush1.bf16.xpose.msra.mxu0 0
        %949 = vmatprep.subr.bf16.mxu0 0
        %950 = vmatpush1.bf16.xpose.msra.mxu0 0
        %951 = vmatprep.subr.bf16.mxu0 0
        %952 = vmatpush1.bf16.xpose.msra.mxu0 0
        %953 = vmatprep.subr.bf16.mxu0 0
        %954 = vmatpush1.bf16.xpose.msra.mxu0 0
        %955 = vmatprep.subr.bf16.mxu0 0
        %956 = vmatpush1.bf16.xpose.msra.mxu0 0
        %957 = vmatprep.subr.bf16.mxu0 0
        %958 = vmatpush1.bf16.xpose.msra.mxu0 0
        %959 = vmatprep.subr.bf16.mxu0 0
        %960 = vmatpush1.bf16.xpose.msra.mxu0 0
        %961 = vmatprep.subr.bf16.mxu0 0
        %962 = vmatpush1.bf16.xpose.msra.mxu0 0
        %963 = vmatprep.subr.bf16.mxu0 0
        %964 = vmatpush1.bf16.xpose.msra.mxu0 0
        %965 = vmatprep.subr.bf16.mxu0 0
        %966 = vmatpush1.bf16.xpose.msra.mxu0 0
        %967 = vmatprep.subr.bf16.mxu0 0
        %968 = vmatpush1.bf16.xpose.msra.mxu0 0
        %969 = vmatprep.subr.bf16.mxu0 0
        %970 = vmatpush1.bf16.xpose.msra.mxu0 0
        %971 = vmatprep.subr.bf16.mxu0 0
        %972 = vmatpush1.bf16.xpose.msra.mxu0 0
        %973 = vmatprep.subr.bf16.mxu0 0
        %974 = vmatpush1.bf16.xpose.msra.mxu0 0
        %975 = vmatprep.mubr.bf16.mxu0 0
        %976 = vmatmul.mubr.bf16.gmra.mrb[0].mxu0 %v938
        %v977 = vpop.f32.mrb[0].mxu0
        %v978 = vadd.f32 %v796, %v977
        %v979 = vpop.f32.mrb[0].mxu0
        %v980 = vpop.f32.mrb[0].mxu0
        %v981 = vpop.f32.mrb[0].mxu0
        %982 = vdwg.mxu0
        %v983 = vsel %vm798, %v840, -inf
        %984 = vmax.xlane.f32.xlu0 %v983
        %v985 = vpop.xlane.xlu0 %984
        %v986 = vsel %vm798, %v886, -inf
        %987 = vmax.xlane.f32.xlu0 %v986
        %v988 = vpop.xlane.xlu0 %987
        %v989 = vsel %vm798, %v932, -inf
        %990 = vmax.xlane.f32.xlu0 %v989
        %v991 = vpop.xlane.xlu0 %990
        %v992 = vsel %vm798, %v978, -inf
        %993 = vmax.xlane.f32.xlu0 %v992
        %v994 = vpop.xlane.xlu0 %993
        %v995 = vsub.f32 %v840, %v985
        %v996 = vsub.f32 %v886, %v988
        %v997 = vsub.f32 %v932, %v991
        %v998 = vsub.f32 %v978, %v994
        %v999 = vmul.f32 %v995, 1.442695
        %v1000 = vpow.pop %v999
        %v1001 = vmul.f32 %v996, 1.442695
        %v1002 = vpow.pop %v1001
        %v1003 = vmul.f32 %v997, 1.442695
        %v1004 = vpow.pop %v1003
        %v1005 = vmul.f32 %v998, 1.442695
        %v1006 = vpow.pop %v1005
        %v1007 = vsel %vm798, %v1000, 0.0
        %1008 = vadd.xlane.f32.xlu0 %v1007
        %v1009 = vpop.xlane.xlu0 %1008
        %v1010 = vsel %vm798, %v1002, 0.0
        %1011 = vadd.xlane.f32.xlu0 %v1010
        %v1012 = vpop.xlane.xlu0 %1011
        %v1013 = vsel %vm798, %v1004, 0.0
        %1014 = vadd.xlane.f32.xlu0 %v1013
        %v1015 = vpop.xlane.xlu0 %1014
        %v1016 = vsel %vm798, %v1006, 0.0
        %1017 = vadd.xlane.f32.xlu0 %v1016
        %v1018 = vpop.xlane.xlu0 %1017
        %v1019 = vrcp.pop %v1009
        %v1020 = vrcp.pop %v1012
        %v1021 = vrcp.pop %v1015
        %v1022 = vrcp.pop %v1018
        %v1023 = vmul.f32 %v1009, %v1019
        %v1024 = vmul.f32 %v1012, %v1020
        %v1025 = vmul.f32 %v1015, %v1021
        %v1026 = vmul.f32 %v1018, %v1022
        %v1027 = vsub.f32 2.0, %v1023
        %v1028 = vsub.f32 2.0, %v1024
        %v1029 = vsub.f32 2.0, %v1025
        %v1030 = vsub.f32 2.0, %v1026
        %v1031 = vmul.f32 %v1019, %v1027
        %v1032 = vmul.f32 %v1020, %v1028
        %v1033 = vmul.f32 %v1021, %v1029
        %v1034 = vmul.f32 %v1022, %v1030
        %v1035 = vmul.f32 %v1000, %v1031
        %v1036 = vmul.f32 %v1002, %v1032
        %v1037 = vmul.f32 %v1004, %v1033
        %v1038 = vmul.f32 %v1006, %v1034
        %v1039 = vpack.c.bf16 %v1035, %v1035
        %v1040 = vpack.c.bf16 %v1036, %v1036
        %v1041 = vpack.c.bf16 %v1037, %v1037
        %v1042 = vpack.c.bf16 %v1038, %v1038
        %vm1043 = vcmask 60416
        %1044 = vst.msk [vmem:[%s624] sm:$0xf] %vm1043, %v1039
        %1045 = vst.msk [vmem:[%s624 + $0x4] sm:$0xf] %vm1043, %v1040
        %1046 = vst.msk [vmem:[%s624 + $0x8] sm:$0xf] %vm1043, %v1041
        %1047 = vst.msk [vmem:[%s624 + $0xc] sm:$0xf] %vm1043, %v1042
        %1049 = vrot.lane.b32.xlu0 %v787, 96
        %v1050 = vpop.permute.xlu0 %1049
        %v1052 = vsel %vm798, %v1039, 0
        %vm1054 = vcmask 1043456
        %v1056 = vsel %vm1054, %v1050, 0
        %1058 = vmatprep.subr.bf16.mxu0 0
        %1059 = vmatpush1.bf16.msra.mxu0 %v1056
        %1060 = vmatprep.subr.bf16.mxu0 0
        %1061 = vmatpush1.bf16.msra.mxu0 0
        %1062 = vmatprep.subr.bf16.mxu0 0
        %1063 = vmatpush1.bf16.msra.mxu0 0
        %1064 = vmatprep.subr.bf16.mxu0 0
        %1065 = vmatpush1.bf16.msra.mxu0 0
        %1066 = vmatprep.subr.bf16.mxu0 0
        %1067 = vmatpush1.bf16.msra.mxu0 0
        %1068 = vmatprep.subr.bf16.mxu0 0
        %1069 = vmatpush1.bf16.msra.mxu0 0
        %1070 = vmatprep.subr.bf16.mxu0 0
        %1071 = vmatpush1.bf16.msra.mxu0 0
        %1072 = vmatprep.subr.bf16.mxu0 0
        %1073 = vmatpush1.bf16.msra.mxu0 0
        %1074 = vmatprep.subr.bf16.mxu0 0
        %1075 = vmatpush1.bf16.msra.mxu0 0
        %1076 = vmatprep.subr.bf16.mxu0 0
        %1077 = vmatpush1.bf16.msra.mxu0 0
        %1078 = vmatprep.subr.bf16.mxu0 0
        %1079 = vmatpush1.bf16.msra.mxu0 0
        %1080 = vmatprep.subr.bf16.mxu0 0
        %1081 = vmatpush1.bf16.msra.mxu0 0
        %1082 = vmatprep.subr.bf16.mxu0 0
        %1083 = vmatpush1.bf16.msra.mxu0 0
        %1084 = vmatprep.subr.bf16.mxu0 0
        %1085 = vmatpush1.bf16.msra.mxu0 0
        %1086 = vmatprep.subr.bf16.mxu0 0
        %1087 = vmatpush1.bf16.msra.mxu0 0
        %1088 = vmatprep.subr.bf16.mxu0 0
        %1089 = vmatpush1.bf16.msra.mxu0 0
        %1090 = vmatprep.mubr.bf16.mxu0 0
        %1091 = vmatmul.mubr.bf16.gmra.mrb[0].mxu0 %v1052
        %v1092 = vpop.f32.mrb[0].mxu0
        %v1093 = vadd.f32 0.0, %v1092
        %v1094 = vpop.f32.mrb[0].mxu0
        %v1095 = vpop.f32.mrb[0].mxu0
        %v1096 = vpop.f32.mrb[0].mxu0
        %1097 = vdwg.mxu0
        %1099 = vrot.lane.b32.xlu0 %v788, 96
        %v1100 = vpop.permute.xlu0 %1099
        %v1102 = vsel %vm798, %v1040, 0
        %v1105 = vsel %vm1054, %v1100, 0
        %1107 = vmatprep.subr.bf16.mxu0 0
        %1108 = vmatpush1.bf16.msra.mxu0 %v1105
        %1109 = vmatprep.subr.bf16.mxu0 0
        %1110 = vmatpush1.bf16.msra.mxu0 0
        %1111 = vmatprep.subr.bf16.mxu0 0
        %1112 = vmatpush1.bf16.msra.mxu0 0
        %1113 = vmatprep.subr.bf16.mxu0 0
        %1114 = vmatpush1.bf16.msra.mxu0 0
        %1115 = vmatprep.subr.bf16.mxu0 0
        %1116 = vmatpush1.bf16.msra.mxu0 0
        %1117 = vmatprep.subr.bf16.mxu0 0
        %1118 = vmatpush1.bf16.msra.mxu0 0
        %1119 = vmatprep.subr.bf16.mxu0 0
        %1120 = vmatpush1.bf16.msra.mxu0 0
        %1121 = vmatprep.subr.bf16.mxu0 0
        %1122 = vmatpush1.bf16.msra.mxu0 0
        %1123 = vmatprep.subr.bf16.mxu0 0
        %1124 = vmatpush1.bf16.msra.mxu0 0
        %1125 = vmatprep.subr.bf16.mxu0 0
        %1126 = vmatpush1.bf16.msra.mxu0 0
        %1127 = vmatprep.subr.bf16.mxu0 0
        %1128 = vmatpush1.bf16.msra.mxu0 0
        %1129 = vmatprep.subr.bf16.mxu0 0
        %1130 = vmatpush1.bf16.msra.mxu0 0
        %1131 = vmatprep.subr.bf16.mxu0 0
        %1132 = vmatpush1.bf16.msra.mxu0 0
        %1133 = vmatprep.subr.bf16.mxu0 0
        %1134 = vmatpush1.bf16.msra.mxu0 0
        %1135 = vmatprep.subr.bf16.mxu0 0
        %1136 = vmatpush1.bf16.msra.mxu0 0
        %1137 = vmatprep.subr.bf16.mxu0 0
        %1138 = vmatpush1.bf16.msra.mxu0 0
        %1139 = vmatprep.mubr.bf16.mxu0 0
        %1140 = vmatmul.mubr.bf16.gmra.mrb[0].mxu0 %v1102
        %v1141 = vpop.f32.mrb[0].mxu0
        %v1142 = vadd.f32 0.0, %v1141
        %v1143 = vpop.f32.mrb[0].mxu0
        %v1144 = vpop.f32.mrb[0].mxu0
        %v1145 = vpop.f32.mrb[0].mxu0
        %1146 = vdwg.mxu0
        %1148 = vrot.lane.b32.xlu0 %v789, 96
        %v1149 = vpop.permute.xlu0 %1148
        %v1151 = vsel %vm798, %v1041, 0
        %v1154 = vsel %vm1054, %v1149, 0
        %1156 = vmatprep.subr.bf16.mxu0 0
        %1157 = vmatpush1.bf16.msra.mxu0 %v1154
        %1158 = vmatprep.subr.bf16.mxu0 0
        %1159 = vmatpush1.bf16.msra.mxu0 0
        %1160 = vmatprep.subr.bf16.mxu0 0
        %1161 = vmatpush1.bf16.msra.mxu0 0
        %1162 = vmatprep.subr.bf16.mxu0 0
        %1163 = vmatpush1.bf16.msra.mxu0 0
        %1164 = vmatprep.subr.bf16.mxu0 0
        %1165 = vmatpush1.bf16.msra.mxu0 0
        %1166 = vmatprep.subr.bf16.mxu0 0
        %1167 = vmatpush1.bf16.msra.mxu0 0
        %1168 = vmatprep.subr.bf16.mxu0 0
        %1169 = vmatpush1.bf16.msra.mxu0 0
        %1170 = vmatprep.subr.bf16.mxu0 0
        %1171 = vmatpush1.bf16.msra.mxu0 0
        %1172 = vmatprep.subr.bf16.mxu0 0
        %1173 = vmatpush1.bf16.msra.mxu0 0
        %1174 = vmatprep.subr.bf16.mxu0 0
        %1175 = vmatpush1.bf16.msra.mxu0 0
        %1176 = vmatprep.subr.bf16.mxu0 0
        %1177 = vmatpush1.bf16.msra.mxu0 0
        %1178 = vmatprep.subr.bf16.mxu0 0
        %1179 = vmatpush1.bf16.msra.mxu0 0
        %1180 = vmatprep.subr.bf16.mxu0 0
        %1181 = vmatpush1.bf16.msra.mxu0 0
        %1182 = vmatprep.subr.bf16.mxu0 0
        %1183 = vmatpush1.bf16.msra.mxu0 0
        %1184 = vmatprep.subr.bf16.mxu0 0
        %1185 = vmatpush1.bf16.msra.mxu0 0
        %1186 = vmatprep.subr.bf16.mxu0 0
        %1187 = vmatpush1.bf16.msra.mxu0 0
        %1188 = vmatprep.mubr.bf16.mxu0 0
        %1189 = vmatmul.mubr.bf16.gmra.mrb[0].mxu0 %v1151
        %v1190 = vpop.f32.mrb[0].mxu0
        %v1191 = vadd.f32 0.0, %v1190
        %v1192 = vpop.f32.mrb[0].mxu0
        %v1193 = vpop.f32.mrb[0].mxu0
        %v1194 = vpop.f32.mrb[0].mxu0
        %1195 = vdwg.mxu0
        %1197 = vrot.lane.b32.xlu0 %v790, 96
        %v1198 = vpop.permute.xlu0 %1197
        %v1200 = vsel %vm798, %v1042, 0
        %v1203 = vsel %vm1054, %v1198, 0
        %1205 = vmatprep.subr.bf16.mxu0 0
        %1206 = vmatpush1.bf16.msra.mxu0 %v1203
        %1207 = vmatprep.subr.bf16.mxu0 0
        %1208 = vmatpush1.bf16.msra.mxu0 0
        %1209 = vmatprep.subr.bf16.mxu0 0
        %1210 = vmatpush1.bf16.msra.mxu0 0
        %1211 = vmatprep.subr.bf16.mxu0 0
        %1212 = vmatpush1.bf16.msra.mxu0 0
        %1213 = vmatprep.subr.bf16.mxu0 0
        %1214 = vmatpush1.bf16.msra.mxu0 0
        %1215 = vmatprep.subr.bf16.mxu0 0
        %1216 = vmatpush1.bf16.msra.mxu0 0
        %1217 = vmatprep.subr.bf16.mxu0 0
        %1218 = vmatpush1.bf16.msra.mxu0 0
        %1219 = vmatprep.subr.bf16.mxu0 0
        %1220 = vmatpush1.bf16.msra.mxu0 0
        %1221 = vmatprep.subr.bf16.mxu0 0
        %1222 = vmatpush1.bf16.msra.mxu0 0
        %1223 = vmatprep.subr.bf16.mxu0 0
        %1224 = vmatpush1.bf16.msra.mxu0 0
        %1225 = vmatprep.subr.bf16.mxu0 0
        %1226 = vmatpush1.bf16.msra.mxu0 0
        %1227 = vmatprep.subr.bf16.mxu0 0
        %1228 = vmatpush1.bf16.msra.mxu0 0
        %1229 = vmatprep.subr.bf16.mxu0 0
        %1230 = vmatpush1.bf16.msra.mxu0 0
        %1231 = vmatprep.subr.bf16.mxu0 0
        %1232 = vmatpush1.bf16.msra.mxu0 0
        %1233 = vmatprep.subr.bf16.mxu0 0
        %1234 = vmatpush1.bf16.msra.mxu0 0
        %1235 = vmatprep.subr.bf16.mxu0 0
        %1236 = vmatpush1.bf16.msra.mxu0 0
        %1237 = vmatprep.mubr.bf16.mxu0 0
        %1238 = vmatmul.mubr.bf16.gmra.mrb[0].mxu0 %v1200
        %v1239 = vpop.f32.mrb[0].mxu0
        %v1240 = vadd.f32 0.0, %v1239
        %v1241 = vpop.f32.mrb[0].mxu0
        %v1242 = vpop.f32.mrb[0].mxu0
        %v1243 = vpop.f32.mrb[0].mxu0
        %1244 = vdwg.mxu0
        %1246 = vrot.lane.b32.xlu0 %v1142, 8
        %v1247 = vpop.permute.xlu0 %1246
        %1250 = vrot.lane.b32.xlu0 %v1191, 16
        %v1251 = vpop.permute.xlu0 %1250
        %1254 = vrot.lane.b32.xlu0 %v1240, 24
        %v1255 = vpop.permute.xlu0 %1254
        %v1257 = vsel %vm798, %v1093, %v1247
        %vm1258 = vcmask 130048
        %v1259 = vsel %vm1258, %v1257, %v1251
        %vm1260 = vcmask 195584
        %v1261 = vsel %vm1260, %v1259, %v1255
        %v1262 = vpack.c.bf16 %v1261, %v1261
        %v1263 = vld [vmem:[#allocation5] sm:$0xf]
        %v1264 = vld [vmem:[#allocation5 + $0x4] sm:$0xf]
        %v1265 = vld [vmem:[#allocation5 + $0x8] sm:$0xf]
        %v1266 = vld [vmem:[#allocation5 + $0xc] sm:$0xf]
        %v1271 = vunpack.c.l.b16 %v1263
        %v1272 = vunpack.c.l.b16 %v1264
        %v1273 = vunpack.c.l.b16 %v1265
        %v1274 = vunpack.c.l.b16 %v1266
        %v1275 = vpack.c.b16 %v1272, %v1271
        %v1276 = vpack.c.b16 %v1274, %v1273
        %v1280 = vsel %vm659, %v1262, 0
        %1282 = vmatprep.subr.bf16.mxu0 0
        %1283 = vmatpush1.bf16.msra.mxu0 %v1275
        %1284 = vmatprep.subr.bf16.mxu0 0
        %1285 = vmatpush1.bf16.msra.mxu0 %v1276
        %1286 = vmatprep.subr.bf16.mxu0 0
        %1287 = vmatpush1.bf16.msra.mxu0 0
        %1288 = vmatprep.subr.bf16.mxu0 0
        %1289 = vmatpush1.bf16.msra.mxu0 0
        %1290 = vmatprep.subr.bf16.mxu0 0
        %1291 = vmatpush1.bf16.msra.mxu0 0
        %1292 = vmatprep.subr.bf16.mxu0 0
        %1293 = vmatpush1.bf16.msra.mxu0 0
        %1294 = vmatprep.subr.bf16.mxu0 0
        %1295 = vmatpush1.bf16.msra.mxu0 0
        %1296 = vmatprep.subr.bf16.mxu0 0
        %1297 = vmatpush1.bf16.msra.mxu0 0
        %1298 = vmatprep.subr.bf16.mxu0 0
        %1299 = vmatpush1.bf16.msra.mxu0 0
        %1300 = vmatprep.subr.bf16.mxu0 0
        %1301 = vmatpush1.bf16.msra.mxu0 0
        %1302 = vmatprep.subr.bf16.mxu0 0
        %1303 = vmatpush1.bf16.msra.mxu0 0
        %1304 = vmatprep.subr.bf16.mxu0 0
        %1305 = vmatpush1.bf16.msra.mxu0 0
        %1306 = vmatprep.subr.bf16.mxu0 0
        %1307 = vmatpush1.bf16.msra.mxu0 0
        %1308 = vmatprep.subr.bf16.mxu0 0
        %1309 = vmatpush1.bf16.msra.mxu0 0
        %1310 = vmatprep.subr.bf16.mxu0 0
        %1311 = vmatpush1.bf16.msra.mxu0 0
        %1312 = vmatprep.subr.bf16.mxu0 0
        %1313 = vmatpush1.bf16.msra.mxu0 0
        %1314 = vmatprep.mubr.bf16.mxu0 0
        %1315 = vmatmul.mubr.bf16.gmra.mrb[0].mxu0 %v1280
        %v1316 = vpop.f32.mrb[0].mxu0
        %v1317 = vadd.f32 0.0, %v1316
        %v1318 = vpop.f32.mrb[0].mxu0
        %v1319 = vpop.f32.mrb[0].mxu0
        %v1320 = vpop.f32.mrb[0].mxu0
        %1321 = vdwg.mxu0
        %v1322 = vadd.f32 %v640, %v1317
        %v1323 = vsel %vm659, %v1322, 0.0
        %1324 = vadd.xlane.f32.xlu0 %v1323
        %v1325 = vpop.xlane.xlu0 %1324
        %v1326 = vmul.f32 %v1325, 0.03125
        %v1327 = vsub.f32 %v1322, %v1326
        %v1328 = vmul.f32 %v1327, %v1327
        %v1329 = vsel %vm659, %v1328, 0.0
        %1330 = vadd.xlane.f32.xlu0 %v1329
        %v1331 = vpop.xlane.xlu0 %1330
        %v1332 = vmul.f32 %v1331, 0.03125
        %v1333 = vadd.f32 %v1332, 1e-05
        %v1334 = vrsqrt.pop %v1333
        %v1335 = vmul.f32 %v1327, %v1334
        %v1336 = vld [vmem:[#allocation7] sm:$0x1]
        %v1338 = vlaneseq
        %v1339 = vshrl.u32 %v1338, 7
        %v1340 = vsub.s32 0, %v1339
        %v1341 = vrot.slane %v1336, %v1340
        %v1343 = vmul.f32 %v1335, %v1341
        %v1344 = vld [vmem:[#allocation8] sm:$0x1]
        %v1346 = vlaneseq
        %v1347 = vshrl.u32 %v1346, 7
        %v1348 = vsub.s32 0, %v1347
        %v1349 = vrot.slane %v1344, %v1348
        %v1351 = vadd.f32 %v1343, %v1349
        %v1352 = vpack.c.bf16 %v1351, %v1351
        %v1353 = vld [vmem:[%s10] sm:$0xf]
        %v1354 = vld [vmem:[%s10 + $0x4] sm:$0xf]
        %v1355 = vld [vmem:[%s10 + $0x8] sm:$0xf]
        %v1356 = vld [vmem:[%s10 + $0xc] sm:$0xf]
        %v1357 = vld [vmem:[%s11] sm:$0x1]
        %v1359 = vlaneseq
        %v1360 = vshrl.u32 %v1359, 7
        %v1361 = vsub.s32 0, %v1360
        %v1362 = vrot.slane %v1357, %v1361
        %v1368 = vunpack.c.l.b16 %v1353
        %v1369 = vunpack.c.l.b16 %v1354
        %v1370 = vunpack.c.l.b16 %v1355
        %v1371 = vunpack.c.l.b16 %v1356
        %v1372 = vpack.c.b16 %v1369, %v1368
        %v1373 = vpack.c.b16 %v1371, %v1370
        %v1377 = vsel %vm659, %v1352, 0
        %1379 = vmatprep.subr.bf16.mxu0 0
        %1380 = vmatpush1.bf16.msra.mxu0 %v1372
        %1381 = vmatprep.subr.bf16.mxu0 0
        %1382 = vmatpush1.bf16.msra.mxu0 %v1373
        %1383 = vmatprep.subr.bf16.mxu0 0
        %1384 = vmatpush1.bf16.msra.mxu0 0
        %1385 = vmatprep.subr.bf16.mxu0 0
        %1386 = vmatpush1.bf16.msra.mxu0 0
        %1387 = vmatprep.subr.bf16.mxu0 0
        %1388 = vmatpush1.bf16.msra.mxu0 0
        %1389 = vmatprep.subr.bf16.mxu0 0
        %1390 = vmatpush1.bf16.msra.mxu0 0
        %1391 = vmatprep.subr.bf16.mxu0 0
        %1392 = vmatpush1.bf16.msra.mxu0 0
        %1393 = vmatprep.subr.bf16.mxu0 0
        %1394 = vmatpush1.bf16.msra.mxu0 0
        %1395 = vmatprep.subr.bf16.mxu0 0
        %1396 = vmatpush1.bf16.msra.mxu0 0
        %1397 = vmatprep.subr.bf16.mxu0 0
        %1398 = vmatpush1.bf16.msra.mxu0 0
        %1399 = vmatprep.subr.bf16.mxu0 0
        %1400 = vmatpush1.bf16.msra.mxu0 0
        %1401 = vmatprep.subr.bf16.mxu0 0
        %1402 = vmatpush1.bf16.msra.mxu0 0
        %1403 = vmatprep.subr.bf16.mxu0 0
        %1404 = vmatpush1.bf16.msra.mxu0 0
        %1405 = vmatprep.subr.bf16.mxu0 0
        %1406 = vmatpush1.bf16.msra.mxu0 0
        %1407 = vmatprep.subr.bf16.mxu0 0
        %1408 = vmatpush1.bf16.msra.mxu0 0
        %1409 = vmatprep.subr.bf16.mxu0 0
        %1410 = vmatpush1.bf16.msra.mxu0 0
        %1411 = vmatprep.mubr.bf16.mxu0 0
        %1412 = vmatmul.mubr.bf16.gmra.mrb[0].mxu0 %v1377
        %v1413 = vpop.f32.mrb[0].mxu0
        %v1414 = vadd.f32 %v1362, %v1413
        %v1415 = vpop.f32.mrb[0].mxu0
        %v1416 = vpop.f32.mrb[0].mxu0
        %v1417 = vpop.f32.mrb[0].mxu0
        %1418 = vdwg.mxu0
        %v1419 = vmax.f32 %v1414, 0.0
        %v1420 = vpack.c.bf16 %v1419, %v1419
        %v1421 = vld [vmem:[%s12] sm:$0xf]
        %v1422 = vld [vmem:[%s12 + $0x4] sm:$0xf]
        %v1423 = vld [vmem:[%s12 + $0x8] sm:$0xf]
        %v1424 = vld [vmem:[%s12 + $0xc] sm:$0xf]
        %v1425 = vld [vmem:[%s12 + $0x10] sm:$0xf]
        %v1426 = vld [vmem:[%s12 + $0x14] sm:$0xf]
        %v1427 = vld [vmem:[%s12 + $0x18] sm:$0xf]
        %v1428 = vld [vmem:[%s12 + $0x1c] sm:$0xf]
        %v1429 = vld [vmem:[%s13] sm:$0x1]
        %v1431 = vlaneseq
        %v1432 = vshrl.u32 %v1431, 7
        %v1433 = vsub.s32 0, %v1432
        %v1434 = vrot.slane %v1429, %v1433
        %v1444 = vunpack.c.l.b16 %v1421
        %v1445 = vunpack.c.l.b16 %v1422
        %v1446 = vunpack.c.l.b16 %v1423
        %v1447 = vunpack.c.l.b16 %v1424
        %v1448 = vunpack.c.l.b16 %v1425
        %v1449 = vunpack.c.l.b16 %v1426
        %v1450 = vunpack.c.l.b16 %v1427
        %v1451 = vunpack.c.l.b16 %v1428
        %v1452 = vpack.c.b16 %v1445, %v1444
        %v1453 = vpack.c.b16 %v1447, %v1446
        %v1454 = vpack.c.b16 %v1449, %v1448
        %v1455 = vpack.c.b16 %v1451, %v1450
        %vm1460 = vcmask 523264
        %v1462 = vsel %vm1460, %v1420, 0
        %1464 = vmatprep.subr.bf16.mxu0 0
        %1465 = vmatpush1.bf16.msra.mxu0 %v1452
        %1466 = vmatprep.subr.bf16.mxu0 0
        %1467 = vmatpush1.bf16.msra.mxu0 %v1453
        %1468 = vmatprep.subr.bf16.mxu0 0
        %1469 = vmatpush1.bf16.msra.mxu0 %v1454
        %1470 = vmatprep.subr.bf16.mxu0 0
        %1471 = vmatpush1.bf16.msra.mxu0 %v1455
        %1472 = vmatprep.subr.bf16.mxu0 0
        %1473 = vmatpush1.bf16.msra.mxu0 0
        %1474 = vmatprep.subr.bf16.mxu0 0
        %1475 = vmatpush1.bf16.msra.mxu0 0
        %1476 = vmatprep.subr.bf16.mxu0 0
        %1477 = vmatpush1.bf16.msra.mxu0 0
        %1478 = vmatprep.subr.bf16.mxu0 0
        %1479 = vmatpush1.bf16.msra.mxu0 0
        %1480 = vmatprep.subr.bf16.mxu0 0
        %1481 = vmatpush1.bf16.msra.mxu0 0
        %1482 = vmatprep.subr.bf16.mxu0 0
        %1483 = vmatpush1.bf16.msra.mxu0 0
        %1484 = vmatprep.subr.bf16.mxu0 0
        %1485 = vmatpush1.bf16.msra.mxu0 0
        %1486 = vmatprep.subr.bf16.mxu0 0
        %1487 = vmatpush1.bf16.msra.mxu0 0
        %1488 = vmatprep.subr.bf16.mxu0 0
        %1489 = vmatpush1.bf16.msra.mxu0 0
        %1490 = vmatprep.subr.bf16.mxu0 0
        %1491 = vmatpush1.bf16.msra.mxu0 0
        %1492 = vmatprep.subr.bf16.mxu0 0
        %1493 = vmatpush1.bf16.msra.mxu0 0
        %1494 = vmatprep.subr.bf16.mxu0 0
        %1495 = vmatpush1.bf16.msra.mxu0 0
        %1496 = vmatprep.mubr.bf16.mxu0 0
        %1497 = vmatmul.mubr.bf16.gmra.mrb[0].mxu0 %v1462
        %v1498 = vpop.f32.mrb[0].mxu0
        %v1499 = vadd.f32 %v1434, %v1498
        %v1500 = vpop.f32.mrb[0].mxu0
        %v1501 = vpop.f32.mrb[0].mxu0
        %v1502 = vpop.f32.mrb[0].mxu0
        %1503 = vdwg.mxu0
        %v1504 = vadd.f32 %v1351, %v1499
        %v1505 = vsel %vm659, %v1504, 0.0
        %1506 = vadd.xlane.f32.xlu0 %v1505
        %v1507 = vpop.xlane.xlu0 %1506
        %v1508 = vmul.f32 %v1507, 0.03125
        %v1509 = vsub.f32 %v1504, %v1508
        %v1510 = vmul.f32 %v1509, %v1509
        %v1511 = vsel %vm659, %v1510, 0.0
        %1512 = vadd.xlane.f32.xlu0 %v1511
        %v1513 = vpop.xlane.xlu0 %1512
        %v1514 = vmul.f32 %v1513, 0.03125
        %v1515 = vadd.f32 %v1514, 1e-05
        %v1516 = vrsqrt.pop %v1515
        %v1517 = vmul.f32 %v1509, %v1516
        %v1518 = vld [vmem:[#allocation10] sm:$0x1]
        %v1520 = vlaneseq
        %v1521 = vshrl.u32 %v1520, 7
        %v1522 = vsub.s32 0, %v1521
        %v1523 = vrot.slane %v1518, %v1522
        %v1525 = vmul.f32 %v1517, %v1523
        %v1526 = vld [vmem:[#allocation11] sm:$0x1]
        %v1528 = vlaneseq
        %v1529 = vshrl.u32 %v1528, 7
        %v1530 = vsub.s32 0, %v1529
        %v1531 = vrot.slane %v1526, %v1530
        %v1533 = vadd.f32 %v1525, %v1531
        %1534 = vst.msk [vmem:[%s617] sm:$0xff] %vm659, %v1533
        %s1535 = sand.u32 %s370, 1
        %s1536 = scalar_lea.sflag [#allocation4], %s1535
        %s1537 = sand.u32 %s370, 1
        %s1538 = smul.addr %s1537, 8
        %s1539 = scalar_lea.vmem [#allocation13], %s1538
        %s1540 = sand.u32 %s398, 1
        %s1541 = scalar_lea.sflag [#allocation15], %s1540
        %s1542 = sand.u32 %s398, 1
        %s1543 = smul.addr %s1542, 16
        %s1544 = scalar_lea.vmem [#allocation14], %s1543
        // Predicated region
        $region101: #{tpu_custom_call.1} parent=75 // pred_check
          %p1545 = pneg %p380
        $region102: #{tpu_custom_call.1} parent=75 // pred_check_branch
          %1547 = sbr.rel (%p1545) target = $region104
        $region103: #{tpu_custom_call.1} parent=75 // pred_region
          %s1549 = ssub.s32 128, 128
          %1550 = vsyncadd %s1536, %s1549
          %s1551 = sadd.s32 %s42, %s41
          %s1552 = smul.addr %s1551, 128
          %s1553 = scalar_lea.hbm %s14, %s1552
          %s1555 = sshll.u32 %s1539, 4
          %s1556 = int_to_ptr.vmem [resolvable:$true] %s1555
          %1558 = dma.vmem_to_hbm [thread:$0]  %s1556, 128, %s1553, %s1536
        $region104: #{tpu_custom_call.1} parent=75 // pred_fallthru
          _
        // Predicated region
        $region105: #{tpu_custom_call.1} parent=75 // pred_check
          %p1559 = pneg %p408
        $region106: #{tpu_custom_call.1} parent=75 // pred_check_branch
          %1561 = sbr.rel (%p1559) target = $region108
        $region107: #{tpu_custom_call.1} parent=75 // pred_region
          %s1563 = ssub.s32 256, 256
          %1564 = vsyncadd %s1541, %s1563
          %s1565 = smul.addr %s41, 4
          %s1566 = sadd.s32 %s42, %s1565
          %s1567 = smul.addr %s1566, 64
          %s1568 = scalar_lea.hbm %s15, %s1567
          %s1569 = sshll.u32 %s1544, 4
          %s1570 = int_to_ptr.vmem [resolvable:$true] %s1569
          %1575 = dma.vmem_to_hbm [thread:$0]  %s1570, 256, %s1568, %s1541, 64, 64, 4
        $region108: #{tpu_custom_call.1} parent=75 // pred_fallthru
          _
      $region76: #{tpu_custom_call.1} parent=5 // pred_fallthru
        _
      %p1576 = scmp.le.s32.totalorder 2, %s32
      // Predicated region
      $region109: #{tpu_custom_call.1} parent=5 // pred_check
        %p1577 = pneg %p1576
      $region110: #{tpu_custom_call.1} parent=5 // pred_check_branch
        %1579 = sbr.rel (%p1577) target = $region112
      $region111: #{tpu_custom_call.1} parent=5 // pred_region
        %s1580 = ssub.s32 %s32, 2
        // Predicated region
        $region113: #{tpu_custom_call.1} parent=111 // pred_check
          %p1581 = pneg %p386
        $region114: #{tpu_custom_call.1} parent=111 // pred_check_branch
          %1583 = sbr.rel (%p1581) target = $region116
        $region115: #{tpu_custom_call.1} parent=111 // pred_region
          %s1584 = sand.u32 %s371, 1
          %s1585 = scalar_lea.sflag [#allocation4], %s1584
          %s1586 = sand.u32 %s371, 1
          %s1587 = smul.addr %s1586, 8
          %s1588 = scalar_lea.vmem [#allocation13], %s1587
          %1589 = dma.done %s1585, 128
        $region116: #{tpu_custom_call.1} parent=111 // pred_fallthru
          _
        // Predicated region
        $region117: #{tpu_custom_call.1} parent=111 // pred_check
          %p1590 = pneg %p414
        $region118: #{tpu_custom_call.1} parent=111 // pred_check_branch
          %1592 = sbr.rel (%p1590) target = $region120
        $region119: #{tpu_custom_call.1} parent=111 // pred_region
          %s1593 = sand.u32 %s399, 1
          %s1594 = scalar_lea.sflag [#allocation15], %s1593
          %s1595 = sand.u32 %s399, 1
          %s1596 = smul.addr %s1595, 16
          %s1597 = scalar_lea.vmem [#allocation14], %s1596
          %1598 = dma.done %s1594, 256
        $region120: #{tpu_custom_call.1} parent=111 // pred_fallthru
          _
      $region112: #{tpu_custom_call.1} parent=5 // pred_fallthru
        _
    $region6: #{tpu_custom_call.1} parent=1 // loop_footer
      %s36 = sadd.s32 1, %s32
    $region7: #{tpu_custom_call.1} parent=1 // loop_footer_branch
      %31 = sbr.rel target = $region3
    $region8: #{tpu_custom_call.1} parent=1 // loop_exit
      _
    %1599 = vsyncpa [#allocation3], 1
    %s1600 = scalar_lea.sflag [#allocation3], 1
    %1601 = vsyncpa %s1600, 1
    %1602 = vsyncpa [#allocation6], 1
    %1603 = vsyncpa [#allocation9], 1
    %1604 = vsyncpa [#allocation12], 1
    %1605 = vsyncpa [#allocation4], 1
    %s1606 = scalar_lea.sflag [#allocation4], 1
    %1607 = vsyncpa %s1606, 1
    %1608 = vsyncpa [#allocation15], 1
    %s1609 = scalar_lea.sflag [#allocation15], 1
    %1610 = vsyncpa %s1609, 1

</llo_original>
